<compile_context>
chip_gen: v7x
topology: tpu7x:2x2x1
jax: 0.10.0
libtpu: 0.0.40
codegen_flags: <defaults>
</compile_context>

<pallas_src>
import functools

import jax
import jax.numpy as jnp
from jax.experimental import pallas as pl
from jax.experimental.pallas import tpu as pltpu


def _sigmoid_eup(x):
    # sigmoid(x) == 0.5 * (tanh(x / 2) + 1); keeps the nonlinearity on the EUP.
    return 0.5 * (jnp.tanh(0.5 * x) + 1.0)


def gru_fc_kernel(x_ref, wih_ref, whh_ref, brz_ref, bhn_ref, wfc_ref, bfc_ref,
                  out_ref, gi_scr, h_scr, *, Tc, Bp, Hp):
    """One grid step = one chunk of Tc timesteps.

    x_ref   : (Tc*Bp, E)    bf16  this chunk of the batch-padded input sequence
    wih_ref : (E, 3*Hp)     bf16  input weights, gate-padded to Hp lanes (r,z,n)
    whh_ref : (Hp, 3*Hp)    bf16  hidden weights, gate-padded (padded rows/cols 0)
    brz_ref : (1, 3*Hp)     f32   folded biases [b_ir+b_hr, b_iz+b_hz, b_in]
    bhn_ref : (1, Hp)       f32   b_hn (stays inside r * (...) to match PyTorch)
    wfc_ref : (Hp, C)       bf16  final linear weights (padded rows 0)
    bfc_ref : (1, C)        f32
    out_ref : (Bp, C)       f32   written on the last chunk only
    gi_scr  : (Tc*Bp, 3*Hp) f32   VMEM scratch: hoisted input projection
    h_scr   : (Bp, Hp)      f32   hidden state carried across grid steps
    """
    chunk = pl.program_id(0)

    @pl.when(chunk == 0)
    def _():
        h_scr[...] = jnp.zeros_like(h_scr)

    # Hoisted input projection for the whole chunk: one MXU call covers Tc
    # timesteps and all three gates; stored to VMEM so vreg pressure is O(1).
    gi_scr[...] = (jnp.dot(x_ref[...], wih_ref[...],
                           preferred_element_type=jnp.float32)
                   + brz_ref[...])

    w_hh = whh_ref[...]          # (Hp, 3Hp) bf16, resident for the whole chunk
    b_hn = bhn_ref[...]          # (1, Hp)   f32

    # TODO(synk): W_hh could be staged once in MXU weight registers via
    # pltpu.matmul_push_rhs / matmul_acc_lhs / matmul_pop to shave the per-step
    # RHS push off the serial path; kept as jnp.dot for lowering robustness.
    def step(t, h):
        row = pl.multiple_of(t * Bp, Bp)                     # aligned vld
        gi_t = gi_scr[pl.ds(row, Bp), :]                     # (Bp, 3Hp) f32
        gh = jnp.dot(h.astype(jnp.bfloat16), w_hh,
                     preferred_element_type=jnp.float32)     # (Bp, 3Hp) f32
        r = _sigmoid_eup(gi_t[:, 0:Hp] + gh[:, 0:Hp])
        z = _sigmoid_eup(gi_t[:, Hp:2 * Hp] + gh[:, Hp:2 * Hp])
        n = jnp.tanh(gi_t[:, 2 * Hp:3 * Hp]
                     + r * (gh[:, 2 * Hp:3 * Hp] + b_hn))
        return (1.0 - z) * n + z * h                         # all gate math f32

    h = jax.lax.fori_loop(0, Tc, step, h_scr[...], unroll=min(4, Tc))
    h_scr[...] = h                                           # one store per chunk

    @pl.when(chunk == pl.num_programs(0) - 1)
    def _():
        out_ref[...] = (jnp.dot(h.astype(jnp.bfloat16), wfc_ref[...],
                                preferred_element_type=jnp.float32)
                        + bfc_ref[...]).astype(out_ref.dtype)


def _largest_divisor_at_most(n, target):
    d = min(n, max(1, target))
    while n % d != 0:
        d -= 1
    return d


@functools.partial(jax.jit, static_argnames=("time_chunk",))
def rnn_forward(x, w_ih, w_hh, b_ih, b_hh, w_fc, b_fc, *, time_chunk=64):
    """x: (T, B, E) f32; PyTorch GRU weight layout. Returns (B, n_classes) f32."""
    T, B, E = x.shape
    H = w_hh.shape[1]
    C = w_fc.shape[0]
    Hp = ((H + 127) // 128) * 128        # lane-aligned per-gate width (>= 128)
    Bp = ((B + 7) // 8) * 8              # sublane-aligned batch (f32 tile = 8)
    Tc = _largest_divisor_at_most(T, time_chunk)
    n_chunks = T // Tc

    f32, bf16 = jnp.float32, jnp.bfloat16

    def pad_gate_cols(w_t):              # (K, 3H) -> (K, 3Hp), zero padding
        K = w_t.shape[0]
        out = jnp.zeros((K, 3 * Hp), f32)
        for g in range(3):
            out = out.at[:, g * Hp:g * Hp + H].set(w_t[:, g * H:(g + 1) * H])
        return out

    def pad_gate_vec(v):                 # (H,) -> (Hp,)
        return jnp.zeros((Hp,), f32).at[:H].set(v.astype(f32))

    wih_p = pad_gate_cols(w_ih.T.astype(f32))                          # (E, 3Hp)
    whh_p = jnp.zeros((Hp, 3 * Hp), f32).at[:H, :].set(
        pad_gate_cols(w_hh.T.astype(f32)))                             # (Hp, 3Hp)

    b_rz = jnp.concatenate([
        pad_gate_vec(b_ih[0:H] + b_hh[0:H]),            # r: fold b_hr
        pad_gate_vec(b_ih[H:2 * H] + b_hh[H:2 * H]),    # z: fold b_hz
        pad_gate_vec(b_ih[2 * H:3 * H]),                # n: only b_in here
    ]).reshape(1, 3 * Hp)
    b_hn = pad_gate_vec(b_hh[2 * H:3 * H]).reshape(1, Hp)

    wfc_p = jnp.zeros((Hp, C), f32).at[:H, :].set(w_fc.T.astype(f32))  # (Hp, C)
    bfc2 = b_fc.reshape(1, C).astype(f32)

    # Pad batch to a full sublane tile; padded rows are zero inputs and are
    # sliced off the output (batch rows are independent -> no contamination).
    x_p = jnp.zeros((T, Bp, E), bf16).at[:, :B, :].set(x.astype(bf16))
    x2 = x_p.reshape(T * Bp, E)

    vmem = pltpu.MemorySpace.VMEM
    weight_spec = pl.BlockSpec(memory_space=vmem)   # whole array resident once

    vmem_bytes = (2 * Tc * Bp * E * 2                          # x chunk, 2 buffers
                  + (E * 3 * Hp + Hp * 3 * Hp + Hp * C) * 2    # bf16 weights
                  + (3 * Hp + Hp + C) * 4                      # f32 biases
                  + Tc * Bp * 3 * Hp * 4                       # GI scratch
                  + Bp * Hp * 4 + Bp * C * 4)                  # h carry + out
    vmem_limit = int(min(max(2 * vmem_bytes + (1 << 20), 16 << 20), 32 << 20))

    cost = pl.CostEstimate(
        flops=2 * T * Bp * (E + Hp) * 3 * Hp + 2 * Bp * Hp * C + 10 * T * Bp * Hp,
        transcendentals=3 * T * Bp * Hp,
        bytes_accessed=(x2.size * 2
                        + (wih_p.size + whh_p.size + wfc_p.size) * 2
                        + (b_rz.size + b_hn.size + bfc2.size + Bp * C) * 4),
    )

    kernel = functools.partial(gru_fc_kernel, Tc=Tc, Bp=Bp, Hp=Hp)
    out = pl.pallas_call(
        kernel,
        out_shape=jax.ShapeDtypeStruct((Bp, C), f32),
        grid_spec=pltpu.PrefetchScalarGridSpec(
            num_scalar_prefetch=0,
            grid=(n_chunks,),
            in_specs=[
                pl.BlockSpec((Tc * Bp, E), lambda c: (c, 0)),   # x: chunked
                weight_spec,   # wih
                weight_spec,   # whh
                weight_spec,   # brz
                weight_spec,   # bhn
                weight_spec,   # wfc
                weight_spec,   # bfc
            ],
            out_specs=pl.BlockSpec((Bp, C), lambda c: (0, 0)),
            scratch_shapes=[
                pltpu.VMEM((Tc * Bp, 3 * Hp), f32),   # GI scratch
                pltpu.VMEM((Bp, Hp), f32),            # hidden-state carry
            ],
        ),
        compiler_params=pltpu.CompilerParams(
            dimension_semantics=("arbitrary",),       # serial recurrence
            vmem_limit_bytes=vmem_limit,
        ),
        cost_estimate=cost,
    )(x2, wih_p.astype(bf16), whh_p.astype(bf16), b_rz, b_hn,
      wfc_p.astype(bf16), bfc2)
    return out[:B]


def rnn_reference(x, w_ih, w_hh, b_ih, b_hh, w_fc, b_fc):
    """Pure-JAX f32 reference matching torch.nn.GRU + Linear semantics."""
    T, B, E = x.shape
    H = w_hh.shape[1]

    def step(h, x_t):
        gi = x_t @ w_ih.T + b_ih
        gh = h @ w_hh.T + b_hh
        r = jax.nn.sigmoid(gi[:, 0:H] + gh[:, 0:H])
        z = jax.nn.sigmoid(gi[:, H:2 * H] + gh[:, H:2 * H])
        n = jnp.tanh(gi[:, 2 * H:3 * H] + r * gh[:, 2 * H:3 * H])
        h_new = (1.0 - z) * n + z * h
        return h_new, None

    h0 = jnp.zeros((B, H), jnp.float32)
    h_last, _ = jax.lax.scan(step, h0, x)
    return h_last @ w_fc.T + b_fc


if __name__ == "__main__":
    embedding_dim, hidden_dim, n_classes = 16, 32, 4
    seq_len, batch = 8, 2

    key = jax.random.PRNGKey(0)
    ks = jax.random.split(key, 8)
    bound = 1.0 / jnp.sqrt(hidden_dim)

    x = jax.random.normal(ks[0], (seq_len, batch, embedding_dim), jnp.float32)
    w_ih = jax.random.uniform(ks[1], (3 * hidden_dim, embedding_dim),
                              jnp.float32, -bound, bound)
    w_hh = jax.random.uniform(ks[2], (3 * hidden_dim, hidden_dim),
                              jnp.float32, -bound, bound)
    b_ih = jax.random.uniform(ks[3], (3 * hidden_dim,), jnp.float32, -bound, bound)
    b_hh = jax.random.uniform(ks[4], (3 * hidden_dim,), jnp.float32, -bound, bound)
    w_fc = jax.random.uniform(ks[5], (n_classes, hidden_dim),
                              jnp.float32, -bound, bound)
    b_fc = jax.random.uniform(ks[6], (n_classes,), jnp.float32, -bound, bound)

    # time_chunk=4 -> grid of 2 chunks, exercising the carried-h / pl.when path.
    out = rnn_forward(x, w_ih, w_hh, b_ih, b_hh, w_fc, b_fc, time_chunk=4)
    out = jax.block_until_ready(out)

    ref = rnn_reference(x, w_ih, w_hh, b_ih, b_hh, w_fc, b_fc)
    assert out.shape == (batch, n_classes)
    # bf16 MXU dots vs pure-f32 reference -> relaxed tolerance.
    assert jnp.allclose(out, ref, atol=2e-2, rtol=2e-2), (out, ref)

    print("KERNEL_OK")
</pallas_src>

<mosaic_0001>
module attributes {stable_mosaic.version = 11 : i64} {
  func.func @gru_fc_kernel(%arg0: i32, %arg1: memref<32x16xbf16, #tpu.memory_space<vmem>>, %arg2: memref<16x384xbf16, #tpu.memory_space<vmem>>, %arg3: memref<128x384xbf16, #tpu.memory_space<vmem>>, %arg4: memref<1x384xf32, #tpu.memory_space<vmem>>, %arg5: memref<1x128xf32, #tpu.memory_space<vmem>>, %arg6: memref<128x4xbf16, #tpu.memory_space<vmem>>, %arg7: memref<1x4xf32, #tpu.memory_space<vmem>>, %arg8: memref<8x4xf32, #tpu.memory_space<vmem>>, %arg9: memref<32x384xf32, #tpu.memory_space<vmem>>, %arg10: memref<8x128xf32, #tpu.memory_space<vmem>>) attributes {dimension_semantics = [#tpu.dimension_semantics<arbitrary>], iteration_bounds = array<i64: 2>, scalar_prefetch = 0 : i64, scratch_operands = 2 : i64, tpu.core_type = #tpu.core_type<tc>, window_params = [{transform_indices = @transform_0, window_bounds = array<i64: 32, 16>}, {pipeline_mode = #tpu.pipeline_mode<synchronous>, transform_indices = @transform_1, window_bounds = array<i64: 16, 384>}, {pipeline_mode = #tpu.pipeline_mode<synchronous>, transform_indices = @transform_2, window_bounds = array<i64: 128, 384>}, {pipeline_mode = #tpu.pipeline_mode<synchronous>, transform_indices = @transform_3, window_bounds = array<i64: 1, 384>}, {pipeline_mode = #tpu.pipeline_mode<synchronous>, transform_indices = @transform_4, window_bounds = array<i64: 1, 128>}, {pipeline_mode = #tpu.pipeline_mode<synchronous>, transform_indices = @transform_5, window_bounds = array<i64: 128, 4>}, {pipeline_mode = #tpu.pipeline_mode<synchronous>, transform_indices = @transform_6, window_bounds = array<i64: 1, 4>}, {pipeline_mode = #tpu.pipeline_mode<synchronous>, transform_indices = @transform_7, window_bounds = array<i64: 8, 4>}]} {
    %c0_i32 = arith.constant 0 : i32
    %0 = arith.cmpi eq, %arg0, %c0_i32 : i32
    %1 = arith.extui %0 : i1 to i32
    %c0_i32_0 = arith.constant 0 : i32
    %2 = arith.cmpi ne, %1, %c0_i32_0 : i32
    scf.if %2 {
      %cst_58 = arith.constant 0.000000e+00 : f32
      %169 = vector.broadcast %cst_58 : f32 to vector<8x128xf32>
      %c0_59 = arith.constant 0 : index
      %c0_60 = arith.constant 0 : index
      %170 = vector.load %arg10[%c0_59, %c0_60] : memref<8x128xf32, #tpu.memory_space<vmem>>, vector<8x128xf32>
      tpu.vector_store %arg10[%c0_59, %c0_60], %169 {strides = array<i32>} : memref<8x128xf32, #tpu.memory_space<vmem>>, vector<8x128xf32>,
    } else {
    }
    %c0 = arith.constant 0 : index
    %c0_1 = arith.constant 0 : index
    %3 = vector.load %arg1[%c0, %c0_1] : memref<32x16xbf16, #tpu.memory_space<vmem>>, vector<32x16xbf16>
    %c0_2 = arith.constant 0 : index
    %c0_3 = arith.constant 0 : index
    %4 = vector.load %arg2[%c0_2, %c0_3] : memref<16x384xbf16, #tpu.memory_space<vmem>>, vector<16x384xbf16>
    %cst = arith.constant dense<0.000000e+00> : vector<32x384xf32>
    %5 = tpu.matmul %3, %4, %cst {dimension_numbers = #tpu.dot_dimension_numbers<[1], [0], [0], [1], [0, 0, 1, 1], [], []>} : vector<32x16xbf16>, vector<16x384xbf16>, vector<32x384xf32> -> vector<32x384xf32>
    %c0_4 = arith.constant 0 : index
    %c0_5 = arith.constant 0 : index
    %6 = vector.load %arg4[%c0_4, %c0_5] : memref<1x384xf32, #tpu.memory_space<vmem>>, vector<1x384xf32>
    %7 = vector.broadcast %6 : vector<1x384xf32> to vector<32x384xf32>
    %8 = arith.addf %5, %7 : vector<32x384xf32>
    %c0_6 = arith.constant 0 : index
    %c0_7 = arith.constant 0 : index
    %9 = vector.load %arg9[%c0_6, %c0_7] : memref<32x384xf32, #tpu.memory_space<vmem>>, vector<32x384xf32>
    tpu.vector_store %arg9[%c0_6, %c0_7], %8 {strides = array<i32>} : memref<32x384xf32, #tpu.memory_space<vmem>>, vector<32x384xf32>,
    %c0_8 = arith.constant 0 : index
    %c0_9 = arith.constant 0 : index
    %10 = vector.load %arg3[%c0_8, %c0_9] : memref<128x384xbf16, #tpu.memory_space<vmem>>, vector<128x384xbf16>
    %c0_10 = arith.constant 0 : index
    %c0_11 = arith.constant 0 : index
    %11 = vector.load %arg5[%c0_10, %c0_11] : memref<1x128xf32, #tpu.memory_space<vmem>>, vector<1x128xf32>
    %c0_12 = arith.constant 0 : index
    %c0_13 = arith.constant 0 : index
    %12 = vector.load %arg10[%c0_12, %c0_13] : memref<8x128xf32, #tpu.memory_space<vmem>>, vector<8x128xf32>
    %c0_i32_14 = arith.constant 0 : i32
    %c8_i32 = arith.constant 8 : i32
    %13 = arith.muli %c0_i32_14, %c8_i32 : i32
    %14 = tpu.assume_multiple %13, 8 : i32
    %15 = arith.index_cast %14 : i32 to index
    %c0_15 = arith.constant 0 : index
    %16 = vector.load %arg9[%15, %c0_15] : memref<32x384xf32, #tpu.memory_space<vmem>>, vector<8x384xf32>
    %17 = arith.truncf %12 : vector<8x128xf32> to vector<8x128xbf16>
    %cst_16 = arith.constant dense<0.000000e+00> : vector<8x384xf32>
    %18 = tpu.matmul %17, %10, %cst_16 {dimension_numbers = #tpu.dot_dimension_numbers<[1], [0], [0], [1], [0, 0, 1, 1], [], []>} : vector<8x128xbf16>, vector<128x384xbf16>, vector<8x384xf32> -> vector<8x384xf32>
    %19 = vector.extract_strided_slice %16 {offsets = [0, 0], sizes = [8, 128], strides = [1, 1]} : vector<8x384xf32> to vector<8x128xf32>
    %20 = vector.extract_strided_slice %18 {offsets = [0, 0], sizes = [8, 128], strides = [1, 1]} : vector<8x384xf32> to vector<8x128xf32>
    %21 = arith.addf %19, %20 : vector<8x128xf32>
    %cst_17 = arith.constant 5.000000e-01 : f32
    %22 = vector.broadcast %cst_17 : f32 to vector<8x128xf32>
    %23 = arith.mulf %22, %21 : vector<8x128xf32>
    %24 = math.tanh %23 : vector<8x128xf32>
    %cst_18 = arith.constant 1.000000e+00 : f32
    %25 = vector.broadcast %cst_18 : f32 to vector<8x128xf32>
    %26 = arith.addf %24, %25 : vector<8x128xf32>
    %cst_19 = arith.constant 5.000000e-01 : f32
    %27 = vector.broadcast %cst_19 : f32 to vector<8x128xf32>
    %28 = arith.mulf %27, %26 : vector<8x128xf32>
    %29 = vector.extract_strided_slice %16 {offsets = [0, 128], sizes = [8, 128], strides = [1, 1]} : vector<8x384xf32> to vector<8x128xf32>
    %30 = vector.extract_strided_slice %18 {offsets = [0, 128], sizes = [8, 128], strides = [1, 1]} : vector<8x384xf32> to vector<8x128xf32>
    %31 = arith.addf %29, %30 : vector<8x128xf32>
    %cst_20 = arith.constant 5.000000e-01 : f32
    %32 = vector.broadcast %cst_20 : f32 to vector<8x128xf32>
    %33 = arith.mulf %32, %31 : vector<8x128xf32>
    %34 = math.tanh %33 : vector<8x128xf32>
    %cst_21 = arith.constant 1.000000e+00 : f32
    %35 = vector.broadcast %cst_21 : f32 to vector<8x128xf32>
    %36 = arith.addf %34, %35 : vector<8x128xf32>
    %cst_22 = arith.constant 5.000000e-01 : f32
    %37 = vector.broadcast %cst_22 : f32 to vector<8x128xf32>
    %38 = arith.mulf %37, %36 : vector<8x128xf32>
    %39 = vector.extract_strided_slice %16 {offsets = [0, 256], sizes = [8, 128], strides = [1, 1]} : vector<8x384xf32> to vector<8x128xf32>
    %40 = vector.extract_strided_slice %18 {offsets = [0, 256], sizes = [8, 128], strides = [1, 1]} : vector<8x384xf32> to vector<8x128xf32>
    %41 = vector.broadcast %11 : vector<1x128xf32> to vector<8x128xf32>
    %42 = arith.addf %40, %41 : vector<8x128xf32>
    %43 = arith.mulf %28, %42 : vector<8x128xf32>
    %44 = arith.addf %39, %43 : vector<8x128xf32>
    %45 = math.tanh %44 : vector<8x128xf32>
    %cst_23 = arith.constant 1.000000e+00 : f32
    %46 = vector.broadcast %cst_23 : f32 to vector<8x128xf32>
    %47 = arith.subf %46, %38 : vector<8x128xf32>
    %48 = arith.mulf %47, %45 : vector<8x128xf32>
    %49 = arith.mulf %38, %12 : vector<8x128xf32>
    %50 = arith.addf %48, %49 : vector<8x128xf32>
    %c1_i32 = arith.constant 1 : i32
    %c8_i32_24 = arith.constant 8 : i32
    %51 = arith.muli %c1_i32, %c8_i32_24 : i32
    %52 = tpu.assume_multiple %51, 8 : i32
    %53 = arith.index_cast %52 : i32 to index
    %c0_25 = arith.constant 0 : index
    %54 = vector.load %arg9[%53, %c0_25] : memref<32x384xf32, #tpu.memory_space<vmem>>, vector<8x384xf32>
    %55 = arith.truncf %50 : vector<8x128xf32> to vector<8x128xbf16>
    %cst_26 = arith.constant dense<0.000000e+00> : vector<8x384xf32>
    %56 = tpu.matmul %55, %10, %cst_26 {dimension_numbers = #tpu.dot_dimension_numbers<[1], [0], [0], [1], [0, 0, 1, 1], [], []>} : vector<8x128xbf16>, vector<128x384xbf16>, vector<8x384xf32> -> vector<8x384xf32>
    %57 = vector.extract_strided_slice %54 {offsets = [0, 0], sizes = [8, 128], strides = [1, 1]} : vector<8x384xf32> to vector<8x128xf32>
    %58 = vector.extract_strided_slice %56 {offsets = [0, 0], sizes = [8, 128], strides = [1, 1]} : vector<8x384xf32> to vector<8x128xf32>
    %59 = arith.addf %57, %58 : vector<8x128xf32>
    %cst_27 = arith.constant 5.000000e-01 : f32
    %60 = vector.broadcast %cst_27 : f32 to vector<8x128xf32>
    %61 = arith.mulf %60, %59 : vector<8x128xf32>
    %62 = math.tanh %61 : vector<8x128xf32>
    %cst_28 = arith.constant 1.000000e+00 : f32
    %63 = vector.broadcast %cst_28 : f32 to vector<8x128xf32>
    %64 = arith.addf %62, %63 : vector<8x128xf32>
    %cst_29 = arith.constant 5.000000e-01 : f32
    %65 = vector.broadcast %cst_29 : f32 to vector<8x128xf32>
    %66 = arith.mulf %65, %64 : vector<8x128xf32>
    %67 = vector.extract_strided_slice %54 {offsets = [0, 128], sizes = [8, 128], strides = [1, 1]} : vector<8x384xf32> to vector<8x128xf32>
    %68 = vector.extract_strided_slice %56 {offsets = [0, 128], sizes = [8, 128], strides = [1, 1]} : vector<8x384xf32> to vector<8x128xf32>
    %69 = arith.addf %67, %68 : vector<8x128xf32>
    %cst_30 = arith.constant 5.000000e-01 : f32
    %70 = vector.broadcast %cst_30 : f32 to vector<8x128xf32>
    %71 = arith.mulf %70, %69 : vector<8x128xf32>
    %72 = math.tanh %71 : vector<8x128xf32>
    %cst_31 = arith.constant 1.000000e+00 : f32
    %73 = vector.broadcast %cst_31 : f32 to vector<8x128xf32>
    %74 = arith.addf %72, %73 : vector<8x128xf32>
    %cst_32 = arith.constant 5.000000e-01 : f32
    %75 = vector.broadcast %cst_32 : f32 to vector<8x128xf32>
    %76 = arith.mulf %75, %74 : vector<8x128xf32>
    %77 = vector.extract_strided_slice %54 {offsets = [0, 256], sizes = [8, 128], strides = [1, 1]} : vector<8x384xf32> to vector<8x128xf32>
    %78 = vector.extract_strided_slice %56 {offsets = [0, 256], sizes = [8, 128], strides = [1, 1]} : vector<8x384xf32> to vector<8x128xf32>
    %79 = vector.broadcast %11 : vector<1x128xf32> to vector<8x128xf32>
    %80 = arith.addf %78, %79 : vector<8x128xf32>
    %81 = arith.mulf %66, %80 : vector<8x128xf32>
    %82 = arith.addf %77, %81 : vector<8x128xf32>
    %83 = math.tanh %82 : vector<8x128xf32>
    %cst_33 = arith.constant 1.000000e+00 : f32
    %84 = vector.broadcast %cst_33 : f32 to vector<8x128xf32>
    %85 = arith.subf %84, %76 : vector<8x128xf32>
    %86 = arith.mulf %85, %83 : vector<8x128xf32>
    %87 = arith.mulf %76, %50 : vector<8x128xf32>
    %88 = arith.addf %86, %87 : vector<8x128xf32>
    %c2_i32 = arith.constant 2 : i32
    %c8_i32_34 = arith.constant 8 : i32
    %89 = arith.muli %c2_i32, %c8_i32_34 : i32
    %90 = tpu.assume_multiple %89, 8 : i32
    %91 = arith.index_cast %90 : i32 to index
    %c0_35 = arith.constant 0 : index
    %92 = vector.load %arg9[%91, %c0_35] : memref<32x384xf32, #tpu.memory_space<vmem>>, vector<8x384xf32>
    %93 = arith.truncf %88 : vector<8x128xf32> to vector<8x128xbf16>
    %cst_36 = arith.constant dense<0.000000e+00> : vector<8x384xf32>
    %94 = tpu.matmul %93, %10, %cst_36 {dimension_numbers = #tpu.dot_dimension_numbers<[1], [0], [0], [1], [0, 0, 1, 1], [], []>} : vector<8x128xbf16>, vector<128x384xbf16>, vector<8x384xf32> -> vector<8x384xf32>
    %95 = vector.extract_strided_slice %92 {offsets = [0, 0], sizes = [8, 128], strides = [1, 1]} : vector<8x384xf32> to vector<8x128xf32>
    %96 = vector.extract_strided_slice %94 {offsets = [0, 0], sizes = [8, 128], strides = [1, 1]} : vector<8x384xf32> to vector<8x128xf32>
    %97 = arith.addf %95, %96 : vector<8x128xf32>
    %cst_37 = arith.constant 5.000000e-01 : f32
    %98 = vector.broadcast %cst_37 : f32 to vector<8x128xf32>
    %99 = arith.mulf %98, %97 : vector<8x128xf32>
    %100 = math.tanh %99 : vector<8x128xf32>
    %cst_38 = arith.constant 1.000000e+00 : f32
    %101 = vector.broadcast %cst_38 : f32 to vector<8x128xf32>
    %102 = arith.addf %100, %101 : vector<8x128xf32>
    %cst_39 = arith.constant 5.000000e-01 : f32
    %103 = vector.broadcast %cst_39 : f32 to vector<8x128xf32>
    %104 = arith.mulf %103, %102 : vector<8x128xf32>
    %105 = vector.extract_strided_slice %92 {offsets = [0, 128], sizes = [8, 128], strides = [1, 1]} : vector<8x384xf32> to vector<8x128xf32>
    %106 = vector.extract_strided_slice %94 {offsets = [0, 128], sizes = [8, 128], strides = [1, 1]} : vector<8x384xf32> to vector<8x128xf32>
    %107 = arith.addf %105, %106 : vector<8x128xf32>
    %cst_40 = arith.constant 5.000000e-01 : f32
    %108 = vector.broadcast %cst_40 : f32 to vector<8x128xf32>
    %109 = arith.mulf %108, %107 : vector<8x128xf32>
    %110 = math.tanh %109 : vector<8x128xf32>
    %cst_41 = arith.constant 1.000000e+00 : f32
    %111 = vector.broadcast %cst_41 : f32 to vector<8x128xf32>
    %112 = arith.addf %110, %111 : vector<8x128xf32>
    %cst_42 = arith.constant 5.000000e-01 : f32
    %113 = vector.broadcast %cst_42 : f32 to vector<8x128xf32>
    %114 = arith.mulf %113, %112 : vector<8x128xf32>
    %115 = vector.extract_strided_slice %92 {offsets = [0, 256], sizes = [8, 128], strides = [1, 1]} : vector<8x384xf32> to vector<8x128xf32>
    %116 = vector.extract_strided_slice %94 {offsets = [0, 256], sizes = [8, 128], strides = [1, 1]} : vector<8x384xf32> to vector<8x128xf32>
    %117 = vector.broadcast %11 : vector<1x128xf32> to vector<8x128xf32>
    %118 = arith.addf %116, %117 : vector<8x128xf32>
    %119 = arith.mulf %104, %118 : vector<8x128xf32>
    %120 = arith.addf %115, %119 : vector<8x128xf32>
    %121 = math.tanh %120 : vector<8x128xf32>
    %cst_43 = arith.constant 1.000000e+00 : f32
    %122 = vector.broadcast %cst_43 : f32 to vector<8x128xf32>
    %123 = arith.subf %122, %114 : vector<8x128xf32>
    %124 = arith.mulf %123, %121 : vector<8x128xf32>
    %125 = arith.mulf %114, %88 : vector<8x128xf32>
    %126 = arith.addf %124, %125 : vector<8x128xf32>
    %c3_i32 = arith.constant 3 : i32
    %c8_i32_44 = arith.constant 8 : i32
    %127 = arith.muli %c3_i32, %c8_i32_44 : i32
    %128 = tpu.assume_multiple %127, 8 : i32
    %129 = arith.index_cast %128 : i32 to index
    %c0_45 = arith.constant 0 : index
    %130 = vector.load %arg9[%129, %c0_45] : memref<32x384xf32, #tpu.memory_space<vmem>>, vector<8x384xf32>
    %131 = arith.truncf %126 : vector<8x128xf32> to vector<8x128xbf16>
    %cst_46 = arith.constant dense<0.000000e+00> : vector<8x384xf32>
    %132 = tpu.matmul %131, %10, %cst_46 {dimension_numbers = #tpu.dot_dimension_numbers<[1], [0], [0], [1], [0, 0, 1, 1], [], []>} : vector<8x128xbf16>, vector<128x384xbf16>, vector<8x384xf32> -> vector<8x384xf32>
    %133 = vector.extract_strided_slice %130 {offsets = [0, 0], sizes = [8, 128], strides = [1, 1]} : vector<8x384xf32> to vector<8x128xf32>
    %134 = vector.extract_strided_slice %132 {offsets = [0, 0], sizes = [8, 128], strides = [1, 1]} : vector<8x384xf32> to vector<8x128xf32>
    %135 = arith.addf %133, %134 : vector<8x128xf32>
    %cst_47 = arith.constant 5.000000e-01 : f32
    %136 = vector.broadcast %cst_47 : f32 to vector<8x128xf32>
    %137 = arith.mulf %136, %135 : vector<8x128xf32>
    %138 = math.tanh %137 : vector<8x128xf32>
    %cst_48 = arith.constant 1.000000e+00 : f32
    %139 = vector.broadcast %cst_48 : f32 to vector<8x128xf32>
    %140 = arith.addf %138, %139 : vector<8x128xf32>
    %cst_49 = arith.constant 5.000000e-01 : f32
    %141 = vector.broadcast %cst_49 : f32 to vector<8x128xf32>
    %142 = arith.mulf %141, %140 : vector<8x128xf32>
    %143 = vector.extract_strided_slice %130 {offsets = [0, 128], sizes = [8, 128], strides = [1, 1]} : vector<8x384xf32> to vector<8x128xf32>
    %144 = vector.extract_strided_slice %132 {offsets = [0, 128], sizes = [8, 128], strides = [1, 1]} : vector<8x384xf32> to vector<8x128xf32>
    %145 = arith.addf %143, %144 : vector<8x128xf32>
    %cst_50 = arith.constant 5.000000e-01 : f32
    %146 = vector.broadcast %cst_50 : f32 to vector<8x128xf32>
    %147 = arith.mulf %146, %145 : vector<8x128xf32>
    %148 = math.tanh %147 : vector<8x128xf32>
    %cst_51 = arith.constant 1.000000e+00 : f32
    %149 = vector.broadcast %cst_51 : f32 to vector<8x128xf32>
    %150 = arith.addf %148, %149 : vector<8x128xf32>
    %cst_52 = arith.constant 5.000000e-01 : f32
    %151 = vector.broadcast %cst_52 : f32 to vector<8x128xf32>
    %152 = arith.mulf %151, %150 : vector<8x128xf32>
    %153 = vector.extract_strided_slice %130 {offsets = [0, 256], sizes = [8, 128], strides = [1, 1]} : vector<8x384xf32> to vector<8x128xf32>
    %154 = vector.extract_strided_slice %132 {offsets = [0, 256], sizes = [8, 128], strides = [1, 1]} : vector<8x384xf32> to vector<8x128xf32>
    %155 = vector.broadcast %11 : vector<1x128xf32> to vector<8x128xf32>
    %156 = arith.addf %154, %155 : vector<8x128xf32>
    %157 = arith.mulf %142, %156 : vector<8x128xf32>
    %158 = arith.addf %153, %157 : vector<8x128xf32>
    %159 = math.tanh %158 : vector<8x128xf32>
    %cst_53 = arith.constant 1.000000e+00 : f32
    %160 = vector.broadcast %cst_53 : f32 to vector<8x128xf32>
    %161 = arith.subf %160, %152 : vector<8x128xf32>
    %162 = arith.mulf %161, %159 : vector<8x128xf32>
    %163 = arith.mulf %152, %126 : vector<8x128xf32>
    %164 = arith.addf %162, %163 : vector<8x128xf32>
    %c4_i32 = arith.constant 4 : i32
    %c0_54 = arith.constant 0 : index
    %c0_55 = arith.constant 0 : index
    %165 = vector.load %arg10[%c0_54, %c0_55] : memref<8x128xf32, #tpu.memory_space<vmem>>, vector<8x128xf32>
    tpu.vector_store %arg10[%c0_54, %c0_55], %164 {strides = array<i32>} : memref<8x128xf32, #tpu.memory_space<vmem>>, vector<8x128xf32>,
    %c1_i32_56 = arith.constant 1 : i32
    %166 = arith.cmpi eq, %arg0, %c1_i32_56 : i32
    %167 = arith.extui %166 : i1 to i32
    %c0_i32_57 = arith.constant 0 : i32
    %168 = arith.cmpi ne, %167, %c0_i32_57 : i32
    scf.if %168 {
      %169 = arith.truncf %164 : vector<8x128xf32> to vector<8x128xbf16>
      %c0_58 = arith.constant 0 : index
      %c0_59 = arith.constant 0 : index
      %170 = vector.load %arg6[%c0_58, %c0_59] : memref<128x4xbf16, #tpu.memory_space<vmem>>, vector<128x4xbf16>
      %cst_60 = arith.constant dense<0.000000e+00> : vector<8x4xf32>
      %171 = tpu.matmul %169, %170, %cst_60 {dimension_numbers = #tpu.dot_dimension_numbers<[1], [0], [0], [1], [0, 0, 1, 1], [], []>} : vector<8x128xbf16>, vector<128x4xbf16>, vector<8x4xf32> -> vector<8x4xf32>
      %c0_61 = arith.constant 0 : index
      %c0_62 = arith.constant 0 : index
      %172 = vector.load %arg7[%c0_61, %c0_62] : memref<1x4xf32, #tpu.memory_space<vmem>>, vector<1x4xf32>
      %173 = vector.broadcast %172 : vector<1x4xf32> to vector<8x4xf32>
      %174 = arith.addf %171, %173 : vector<8x4xf32>
      %c0_63 = arith.constant 0 : index
      %c0_64 = arith.constant 0 : index
      %175 = vector.load %arg8[%c0_63, %c0_64] : memref<8x4xf32, #tpu.memory_space<vmem>>, vector<8x4xf32>
      tpu.vector_store %arg8[%c0_63, %c0_64], %174 {strides = array<i32>} : memref<8x4xf32, #tpu.memory_space<vmem>>, vector<8x4xf32>,
    } else {
    }
    return
  }
  func.func @transform_0(%arg0: i32) -> (i32, i32) {
    %c0_i32 = arith.constant 0 : i32
    %c0_i32_0 = arith.constant 0 : i32
    return %arg0, %c0_i32 : i32, i32
  }
  func.func @transform_1(%arg0: i32) -> (i32, i32) {
    %c0_i32 = arith.constant 0 : i32
    %c0_i32_0 = arith.constant 0 : i32
    %c0_i32_1 = arith.constant 0 : i32
    return %c0_i32, %c0_i32_0 : i32, i32
  }
  func.func @transform_2(%arg0: i32) -> (i32, i32) {
    %c0_i32 = arith.constant 0 : i32
    %c0_i32_0 = arith.constant 0 : i32
    %c0_i32_1 = arith.constant 0 : i32
    return %c0_i32, %c0_i32_0 : i32, i32
  }
  func.func @transform_3(%arg0: i32) -> (i32, i32) {
    %c0_i32 = arith.constant 0 : i32
    %c0_i32_0 = arith.constant 0 : i32
    %c0_i32_1 = arith.constant 0 : i32
    return %c0_i32, %c0_i32_0 : i32, i32
  }
  func.func @transform_4(%arg0: i32) -> (i32, i32) {
    %c0_i32 = arith.constant 0 : i32
    %c0_i32_0 = arith.constant 0 : i32
    %c0_i32_1 = arith.constant 0 : i32
    return %c0_i32, %c0_i32_0 : i32, i32
  }
  func.func @transform_5(%arg0: i32) -> (i32, i32) {
    %c0_i32 = arith.constant 0 : i32
    %c0_i32_0 = arith.constant 0 : i32
    %c0_i32_1 = arith.constant 0 : i32
    return %c0_i32, %c0_i32_0 : i32, i32
  }
  func.func @transform_6(%arg0: i32) -> (i32, i32) {
    %c0_i32 = arith.constant 0 : i32
    %c0_i32_0 = arith.constant 0 : i32
    %c0_i32_1 = arith.constant 0 : i32
    return %c0_i32, %c0_i32_0 : i32, i32
  }
  func.func @transform_7(%arg0: i32) -> (i32, i32) {
    %c0_i32 = arith.constant 0 : i32
    %c0_i32_0 = arith.constant 0 : i32
    %c0_i32_1 = arith.constant 0 : i32
    return %c0_i32, %c0_i32_0 : i32, i32
  }
}

</mosaic_0001>

<llo_original>
// kernel: rnn_forward.1
$region0: #{rnn_forward.1}
  #allocation0 [shape = 'u32[]', space=smem, size = 0x4, offset = 0x4, fixed_abs, tag = 'smem constant byte address 0x4 - core index']
  #allocation1 [shape = 'u32[144,128]{1,0:T(1,128)}', space=vmem, size = 0x12000, scoped, tag = 'internal scratch']
  #allocation2 [shape = 'f32[32,384]{1,0:T(8,128)}', space=vmem, size = 0xc000, scoped, tag = 'scratch operand']
  #allocation3 [shape = 'f32[8,128]{1,0:T(8,128)}', space=vmem, size = 0x1000, scoped, tag = 'scratch operand']
  %s0 = inlined_call_operand.vmem [shape: bf16[64,16], index: 0, kind: input, shape index: {}]
  %s1 = inlined_call_operand.vmem [shape: bf16[16,384], index: 1, kind: input, shape index: {}]
  %s2 = inlined_call_operand.vmem [shape: bf16[128,384], index: 2, kind: input, shape index: {}]
  %s3 = inlined_call_operand.vmem [shape: f32[1,384], index: 3, kind: input, shape index: {}]
  %s4 = inlined_call_operand.vmem [shape: f32[1,128], index: 4, kind: input, shape index: {}]
  %s5 = inlined_call_operand.vmem [shape: bf16[128,4], index: 5, kind: input, shape index: {}]
  %s6 = inlined_call_operand.vmem [shape: f32[1,4], index: 6, kind: input, shape index: {}]
  %s7 = inlined_call_operand.vmem [shape: f32[8,4], index: 7, kind: output, shape index: {}]
  %s8 = sld [smem:[#allocation0]]
  $region69: #{rnn_forward.1} parent=0
    _
  %s10 = ssub.s32 1, %s8
  %s11 = scalar_select 0, %s10, %s8
  loop: start=0, step=1, limit=4
  $region2: #{rnn_forward.1} parent=0 // loop_pre_header
    _
  $region3: #{rnn_forward.1} parent=0 // loop_header
    %s13 = sphi 0, %s17
    %p14 = scmp.ge.s32.totalorder %s13, 4
    %s23 = sphi 0, %s25
    %s26 = sphi 0, %s23
    %s27 = sphi 0, %s26
    %s43 = sphi 0, %s27
    %s47 = sphi 0, %s47
    %s49 = sphi 0, %s47
    %s50 = sphi 0, %s49
    %s64 = sphi 0, %s50
    %s68 = sphi 0, %s68
    %s70 = sphi 0, %s68
    %s71 = sphi 0, %s70
    %s85 = sphi 0, %s71
    %s89 = sphi 0, %s89
    %s91 = sphi 0, %s89
    %s92 = sphi 0, %s91
    %s106 = sphi 0, %s92
    %s110 = sphi 0, %s110
    %s112 = sphi 0, %s110
    %s113 = sphi 0, %s112
    %s127 = sphi 0, %s113
    %s131 = sphi 0, %s131
    %s133 = sphi 0, %s131
    %s134 = sphi 0, %s133
    %s148 = sphi 0, %s134
    %s152 = sphi 0, %s152
    %s154 = sphi 0, %s152
    %s155 = sphi 0, %s154
    %s169 = sphi 0, %s155
    %s173 = sphi 0, %s173
    %s175 = sphi 0, %s173
    %s176 = sphi 0, %s175
    %s190 = sphi 0, %s176
  $region4: #{rnn_forward.1} parent=0 // loop_header_branch
    %16 = sbr.rel (%p14) target = $region8
  $region5: #{rnn_forward.1} parent=0 // loop_body
    %s18 = ssub.s32 %s13, 1
    %s19 = ssub.s32 %s13, 2
    %s20 = sadd.s32 %s13, 1
    %s21 = ssub.s32 %s13, %s20
    %p22 = scmp.eq.s32.totalorder %s21, 0
    %s24 = sadd.s32 %s23, 1
    %s25 = scalar_select %p22, %s23, %s24
    %p28 = pneg %p22
    %p29 = scmp.eq.s32.totalorder %s13, 1
    %p30 = por %p28, %p29
    %p31 = scmp.ne.s32.totalorder %s23, %s26
    %p32 = scmp.eq.s32.totalorder %s13, 0
    %p33 = por %p31, %p32
    %p34 = scmp.ne.s32.totalorder %s23, %s26
    %p35 = scmp.eq.s32.totalorder %s18, 1
    %p36 = por %p34, %p35
    %p37 = scmp.ne.s32.totalorder %s26, %s27
    %p38 = scmp.eq.s32.totalorder %s18, 0
    %p39 = por %p37, %p38
    %p40 = scmp.ne.s32.totalorder %s26, %s27
    %p41 = scmp.eq.s32.totalorder %s19, 1
    %p42 = por %p40, %p41
    %p44 = scmp.ne.s32.totalorder %s27, %s43
    %p45 = scmp.eq.s32.totalorder %s19, 0
    %p46 = por %p44, %p45
    %s48 = sadd.s32 %s47, 1
    %p51 = scmp.eq.s32.totalorder %s13, 1
    %p52 = scmp.ne.s32.totalorder %s47, %s49
    %p53 = scmp.eq.s32.totalorder %s13, 0
    %p54 = por %p52, %p53
    %p55 = scmp.ne.s32.totalorder %s47, %s49
    %p56 = scmp.eq.s32.totalorder %s18, 1
    %p57 = por %p55, %p56
    %p58 = scmp.ne.s32.totalorder %s49, %s50
    %p59 = scmp.eq.s32.totalorder %s18, 0
    %p60 = por %p58, %p59
    %p61 = scmp.ne.s32.totalorder %s49, %s50
    %p62 = scmp.eq.s32.totalorder %s19, 1
    %p63 = por %p61, %p62
    %p65 = scmp.ne.s32.totalorder %s50, %s64
    %p66 = scmp.eq.s32.totalorder %s19, 0
    %p67 = por %p65, %p66
    %s69 = sadd.s32 %s68, 1
    %p72 = scmp.eq.s32.totalorder %s13, 1
    %p73 = scmp.ne.s32.totalorder %s68, %s70
    %p74 = scmp.eq.s32.totalorder %s13, 0
    %p75 = por %p73, %p74
    %p76 = scmp.ne.s32.totalorder %s68, %s70
    %p77 = scmp.eq.s32.totalorder %s18, 1
    %p78 = por %p76, %p77
    %p79 = scmp.ne.s32.totalorder %s70, %s71
    %p80 = scmp.eq.s32.totalorder %s18, 0
    %p81 = por %p79, %p80
    %p82 = scmp.ne.s32.totalorder %s70, %s71
    %p83 = scmp.eq.s32.totalorder %s19, 1
    %p84 = por %p82, %p83
    %p86 = scmp.ne.s32.totalorder %s71, %s85
    %p87 = scmp.eq.s32.totalorder %s19, 0
    %p88 = por %p86, %p87
    %s90 = sadd.s32 %s89, 1
    %p93 = scmp.eq.s32.totalorder %s13, 1
    %p94 = scmp.ne.s32.totalorder %s89, %s91
    %p95 = scmp.eq.s32.totalorder %s13, 0
    %p96 = por %p94, %p95
    %p97 = scmp.ne.s32.totalorder %s89, %s91
    %p98 = scmp.eq.s32.totalorder %s18, 1
    %p99 = por %p97, %p98
    %p100 = scmp.ne.s32.totalorder %s91, %s92
    %p101 = scmp.eq.s32.totalorder %s18, 0
    %p102 = por %p100, %p101
    %p103 = scmp.ne.s32.totalorder %s91, %s92
    %p104 = scmp.eq.s32.totalorder %s19, 1
    %p105 = por %p103, %p104
    %p107 = scmp.ne.s32.totalorder %s92, %s106
    %p108 = scmp.eq.s32.totalorder %s19, 0
    %p109 = por %p107, %p108
    %s111 = sadd.s32 %s110, 1
    %p114 = scmp.eq.s32.totalorder %s13, 1
    %p115 = scmp.ne.s32.totalorder %s110, %s112
    %p116 = scmp.eq.s32.totalorder %s13, 0
    %p117 = por %p115, %p116
    %p118 = scmp.ne.s32.totalorder %s110, %s112
    %p119 = scmp.eq.s32.totalorder %s18, 1
    %p120 = por %p118, %p119
    %p121 = scmp.ne.s32.totalorder %s112, %s113
    %p122 = scmp.eq.s32.totalorder %s18, 0
    %p123 = por %p121, %p122
    %p124 = scmp.ne.s32.totalorder %s112, %s113
    %p125 = scmp.eq.s32.totalorder %s19, 1
    %p126 = por %p124, %p125
    %p128 = scmp.ne.s32.totalorder %s113, %s127
    %p129 = scmp.eq.s32.totalorder %s19, 0
    %p130 = por %p128, %p129
    %s132 = sadd.s32 %s131, 1
    %p135 = scmp.eq.s32.totalorder %s13, 1
    %p136 = scmp.ne.s32.totalorder %s131, %s133
    %p137 = scmp.eq.s32.totalorder %s13, 0
    %p138 = por %p136, %p137
    %p139 = scmp.ne.s32.totalorder %s131, %s133
    %p140 = scmp.eq.s32.totalorder %s18, 1
    %p141 = por %p139, %p140
    %p142 = scmp.ne.s32.totalorder %s133, %s134
    %p143 = scmp.eq.s32.totalorder %s18, 0
    %p144 = por %p142, %p143
    %p145 = scmp.ne.s32.totalorder %s133, %s134
    %p146 = scmp.eq.s32.totalorder %s19, 1
    %p147 = por %p145, %p146
    %p149 = scmp.ne.s32.totalorder %s134, %s148
    %p150 = scmp.eq.s32.totalorder %s19, 0
    %p151 = por %p149, %p150
    %s153 = sadd.s32 %s152, 1
    %p156 = scmp.eq.s32.totalorder %s13, 1
    %p157 = scmp.ne.s32.totalorder %s152, %s154
    %p158 = scmp.eq.s32.totalorder %s13, 0
    %p159 = por %p157, %p158
    %p160 = scmp.ne.s32.totalorder %s152, %s154
    %p161 = scmp.eq.s32.totalorder %s18, 1
    %p162 = por %p160, %p161
    %p163 = scmp.ne.s32.totalorder %s154, %s155
    %p164 = scmp.eq.s32.totalorder %s18, 0
    %p165 = por %p163, %p164
    %p166 = scmp.ne.s32.totalorder %s154, %s155
    %p167 = scmp.eq.s32.totalorder %s19, 1
    %p168 = por %p166, %p167
    %p170 = scmp.ne.s32.totalorder %s155, %s169
    %p171 = scmp.eq.s32.totalorder %s19, 0
    %p172 = por %p170, %p171
    %s174 = sadd.s32 %s173, 1
    %p177 = scmp.eq.s32.totalorder %s13, 1
    %p178 = scmp.ne.s32.totalorder %s173, %s175
    %p179 = scmp.eq.s32.totalorder %s13, 0
    %p180 = por %p178, %p179
    %p181 = scmp.ne.s32.totalorder %s173, %s175
    %p182 = scmp.eq.s32.totalorder %s18, 1
    %p183 = por %p181, %p182
    %p184 = scmp.ne.s32.totalorder %s175, %s176
    %p185 = scmp.eq.s32.totalorder %s18, 0
    %p186 = por %p184, %p185
    %p187 = scmp.ne.s32.totalorder %s175, %s176
    %p188 = scmp.eq.s32.totalorder %s19, 1
    %p189 = por %p187, %p188
    %p191 = scmp.ne.s32.totalorder %s176, %s190
    %p192 = scmp.eq.s32.totalorder %s19, 0
    %p193 = por %p191, %p192
    %p194 = scmp.le.s32.totalorder 1, %s13
    %p195 = scmp.lt.s32.totalorder %s13, 3
    %p196 = pnand %p194, %p195
    %p197 = pneg %p196
    // Predicated region
    $region9: #{rnn_forward.1} parent=5 // pred_check
      _
    $region10: #{rnn_forward.1} parent=5 // pred_check_branch
      %199 = sbr.rel (%p196) target = $region12
    $region11: #{rnn_forward.1} parent=5 // pred_region
      %s200 = ssub.s32 %s13, 1
      // Predicated region
      $region13: #{rnn_forward.1} parent=11 // pred_check
        %p201 = pneg %p60
      $region14: #{rnn_forward.1} parent=11 // pred_check_branch
        %203 = sbr.rel (%p201) target = $region16
      $region15: #{rnn_forward.1} parent=11 // pred_region
        _
      $region16: #{rnn_forward.1} parent=11 // pred_fallthru
        _
      // Predicated region
      $region17: #{rnn_forward.1} parent=11 // pred_check
        %p204 = pneg %p81
      $region18: #{rnn_forward.1} parent=11 // pred_check_branch
        %206 = sbr.rel (%p204) target = $region20
      $region19: #{rnn_forward.1} parent=11 // pred_region
        _
      $region20: #{rnn_forward.1} parent=11 // pred_fallthru
        _
      // Predicated region
      $region21: #{rnn_forward.1} parent=11 // pred_check
        %p207 = pneg %p102
      $region22: #{rnn_forward.1} parent=11 // pred_check_branch
        %209 = sbr.rel (%p207) target = $region24
      $region23: #{rnn_forward.1} parent=11 // pred_region
        _
      $region24: #{rnn_forward.1} parent=11 // pred_fallthru
        _
      // Predicated region
      $region25: #{rnn_forward.1} parent=11 // pred_check
        %p210 = pneg %p123
      $region26: #{rnn_forward.1} parent=11 // pred_check_branch
        %212 = sbr.rel (%p210) target = $region28
      $region27: #{rnn_forward.1} parent=11 // pred_region
        _
      $region28: #{rnn_forward.1} parent=11 // pred_fallthru
        _
      // Predicated region
      $region29: #{rnn_forward.1} parent=11 // pred_check
        %p213 = pneg %p144
      $region30: #{rnn_forward.1} parent=11 // pred_check_branch
        %215 = sbr.rel (%p213) target = $region32
      $region31: #{rnn_forward.1} parent=11 // pred_region
        _
      $region32: #{rnn_forward.1} parent=11 // pred_fallthru
        _
      // Predicated region
      $region33: #{rnn_forward.1} parent=11 // pred_check
        %p216 = pneg %p165
      $region34: #{rnn_forward.1} parent=11 // pred_check_branch
        %218 = sbr.rel (%p216) target = $region36
      $region35: #{rnn_forward.1} parent=11 // pred_region
        _
      $region36: #{rnn_forward.1} parent=11 // pred_fallthru
        _
    $region12: #{rnn_forward.1} parent=5 // pred_fallthru
      _
    %p219 = scmp.lt.s32.totalorder %s13, 2
    // Predicated region
    $region37: #{rnn_forward.1} parent=5 // pred_check
      %p220 = pneg %p219
    $region38: #{rnn_forward.1} parent=5 // pred_check_branch
      %222 = sbr.rel (%p220) target = $region40
    $region39: #{rnn_forward.1} parent=5 // pred_region
      // Predicated region
      $region41: #{rnn_forward.1} parent=39 // pred_check
        %p223 = pneg %p33
      $region42: #{rnn_forward.1} parent=39 // pred_check_branch
        %225 = sbr.rel (%p223) target = $region44
      $region43: #{rnn_forward.1} parent=39 // pred_region
        %s226 = smul.u32 4, %s13
        %p227 = scmp.lt.s32.totalorder %s226, 7
        %s228 = scalar_select %p227, %s226, 7
        %s229 = smul.addr %s228, 4
        %s230 = scalar_lea.vmem %s0, %s229
        %s231 = smul.u32 4, %s13
      $region44: #{rnn_forward.1} parent=39 // pred_fallthru
        _
    $region40: #{rnn_forward.1} parent=5 // pred_fallthru
      _
    %p232 = scmp.le.s32.totalorder 1, %s13
    %p233 = scmp.lt.s32.totalorder %s13, 3
    %p234 = pnand %p232, %p233
    %p235 = pneg %p234
    // Predicated region
    $region45: #{rnn_forward.1} parent=5 // pred_check
      _
    $region46: #{rnn_forward.1} parent=5 // pred_check_branch
      %237 = sbr.rel (%p234) target = $region48
    $region47: #{rnn_forward.1} parent=5 // pred_region
      %s238 = ssub.s32 %s13, 1
      %s239 = smul.u32 4, %s18
      %p240 = scmp.lt.s32.totalorder %s239, 7
      %s241 = scalar_select %p240, %s239, 7
      %s242 = smul.addr %s241, 4
      %s243 = scalar_lea.vmem %s0, %s242
      %p244 = pneg %p39
      %p245 = pneg %p36
      %p246 = pneg %p60
      %p247 = pneg %p57
      %p248 = pneg %p81
      %p249 = pneg %p78
      %p250 = pneg %p102
      %p251 = pneg %p99
      %p252 = pneg %p123
      %p253 = pneg %p120
      %p254 = pneg %p144
      %p255 = pneg %p141
      %p256 = pneg %p165
      %p257 = pneg %p162
      %p258 = pneg %p186
      %p259 = pneg %p183
      %s260 = smul.u32 4, %s18
      %p261 = scmp.lt.s32.totalorder %s260, 7
      %s262 = scalar_select %p261, %s260, 7
      %s263 = smul.addr %s262, 4
      %s264 = scalar_lea.vmem %s0, %s263
      %s265 = smul.u32 4, %s18
      %p267 = scmp.eq.s32.totalorder %s18, 0
      // Predicated region
      $region49: #{rnn_forward.1} parent=47 // pred_check
        %p268 = pneg %p267
      $region50: #{rnn_forward.1} parent=47 // pred_check_branch
        %270 = sbr.rel (%p268) target = $region52
      $region51: #{rnn_forward.1} parent=47 // pred_region
        %271 = vst [vmem:[#allocation3] sm:$0xff] 0.0
      $region52: #{rnn_forward.1} parent=47 // pred_fallthru
        _
      %v272 = vld [vmem:[%s264] sm:$0xf]
      %v273 = vld [vmem:[%s264 + $0x4] sm:$0xf]
      %v274 = vld [vmem:[%s264 + $0x8] sm:$0xf]
      %v275 = vld [vmem:[%s264 + $0xc] sm:$0xf]
      %v276 = vld [vmem:[%s1] sm:$0xff]
      %v277 = vld [vmem:[%s1 + $0x8] sm:$0xf]
      %v278 = vld [vmem:[%s1 + $0xc] sm:$0xff]
      %v279 = vld [vmem:[%s1 + $0x14] sm:$0xf]
      %v280 = vld [vmem:[%s3] sm:$0x7]
      %v282 = vlaneseq
      %v283 = vshrl.u32 %v282, 7
      %v284 = vsub.s32 0, %v283
      %v285 = vrot.slane %v280, %v284
      %v286 = vlaneseq
      %v287 = vshrl.u32 %v286, 7
      %v288 = vsub.s32 1, %v287
      %v289 = vrot.slane %v280, %v288
      %v290 = vlaneseq
      %v291 = vshrl.u32 %v290, 7
      %v292 = vsub.s32 2, %v291
      %v293 = vrot.slane %v280, %v292
      %v301 = vunpack.c.l.b16 %v272
      %v302 = vunpack.c.l.b16 %v273
      %v303 = vunpack.c.l.b16 %v274
      %v304 = vunpack.c.l.b16 %v275
      %v305 = vpack.c.b16 %v302, %v301
      %v306 = vpack.c.b16 %v304, %v303
      %v311 = vunpack.c.l.b16 %v276
      %v312 = vunpack.c.h.b16 %v276
      %v313 = vunpack.c.l.b16 %v277
      %v314 = vunpack.c.l.b16 %v278
      %v315 = vunpack.c.h.b16 %v278
      %v316 = vunpack.c.l.b16 %v279
      %v317 = vpack.c.b16 %v314, %v311
      %v318 = vpack.c.b16 %v315, %v312
      %v319 = vpack.c.b16 %v316, %v313
      %vm323 = vcmask 130048
      %v325 = vsel %vm323, %v305, 0
      %v328 = vsel %vm323, %v306, 0
      %330 = vmatprep.subr.bf16.mxu0 %v318
      %331 = vmatpush1.bf16.msra.mxu0 %v317
      %332 = vmatprep.subr.bf16.mxu0 0
      %333 = vmatpush1.bf16.msra.mxu0 0
      %334 = vmatprep.subr.bf16.mxu0 0
      %335 = vmatpush1.bf16.msra.mxu0 0
      %336 = vmatprep.subr.bf16.mxu0 0
      %337 = vmatpush1.bf16.msra.mxu0 0
      %338 = vmatprep.subr.bf16.mxu0 0
      %339 = vmatpush1.bf16.msra.mxu0 0
      %340 = vmatprep.subr.bf16.mxu0 0
      %341 = vmatpush1.bf16.msra.mxu0 0
      %342 = vmatprep.subr.bf16.mxu0 0
      %343 = vmatpush1.bf16.msra.mxu0 0
      %344 = vmatprep.subr.bf16.mxu0 0
      %345 = vmatpush1.bf16.msra.mxu0 0
      %346 = vmatprep.subr.bf16.mxu0 0
      %347 = vmatpush1.bf16.msra.mxu0 0
      %348 = vmatprep.subr.bf16.mxu0 0
      %349 = vmatpush1.bf16.msra.mxu0 0
      %350 = vmatprep.subr.bf16.mxu0 0
      %351 = vmatpush1.bf16.msra.mxu0 0
      %352 = vmatprep.subr.bf16.mxu0 0
      %353 = vmatpush1.bf16.msra.mxu0 0
      %354 = vmatprep.subr.bf16.mxu0 0
      %355 = vmatpush1.bf16.msra.mxu0 0
      %356 = vmatprep.subr.bf16.mxu0 0
      %357 = vmatpush1.bf16.msra.mxu0 0
      %358 = vmatprep.subr.bf16.mxu0 0
      %359 = vmatpush1.bf16.msra.mxu0 0
      %360 = vmatprep.subr.bf16.mxu0 0
      %361 = vmatpush1.bf16.msra.mxu0 0
      %362 = vmatprep.mubr.bf16.mxu0 0
      %363 = vmatmul.mubr.bf16.gmra.mrb[0].mxu0 %v325
      %v364 = vpop.f32.mrb[0].mxu0
      %v365 = vadd.f32 %v285, %v364
      %v366 = vpop.f32.mrb[0].mxu0
      %v367 = vadd.f32 %v289, %v366
      %v368 = vpop.f32.mrb[0].mxu0
      %v369 = vadd.f32 %v285, %v368
      %v370 = vpop.f32.mrb[0].mxu0
      %v371 = vadd.f32 %v289, %v370
      %372 = vmatprep.mubr.bf16.mxu0 0
      %373 = vmatmul.mubr.bf16.gmra.mrb[0].mxu0 %v328
      %v374 = vpop.f32.mrb[0].mxu0
      %v375 = vadd.f32 %v285, %v374
      %v376 = vpop.f32.mrb[0].mxu0
      %v377 = vadd.f32 %v289, %v376
      %v378 = vpop.f32.mrb[0].mxu0
      %v379 = vadd.f32 %v285, %v378
      %v380 = vpop.f32.mrb[0].mxu0
      %v381 = vadd.f32 %v289, %v380
      %382 = vdwg.mxu0
      %383 = vmatprep.subr.bf16.mxu0 0
      %384 = vmatpush1.bf16.msra.mxu0 %v319
      %385 = vmatprep.subr.bf16.mxu0 0
      %386 = vmatpush1.bf16.msra.mxu0 0
      %387 = vmatprep.subr.bf16.mxu0 0
      %388 = vmatpush1.bf16.msra.mxu0 0
      %389 = vmatprep.subr.bf16.mxu0 0
      %390 = vmatpush1.bf16.msra.mxu0 0
      %391 = vmatprep.subr.bf16.mxu0 0
      %392 = vmatpush1.bf16.msra.mxu0 0
      %393 = vmatprep.subr.bf16.mxu0 0
      %394 = vmatpush1.bf16.msra.mxu0 0
      %395 = vmatprep.subr.bf16.mxu0 0
      %396 = vmatpush1.bf16.msra.mxu0 0
      %397 = vmatprep.subr.bf16.mxu0 0
      %398 = vmatpush1.bf16.msra.mxu0 0
      %399 = vmatprep.subr.bf16.mxu0 0
      %400 = vmatpush1.bf16.msra.mxu0 0
      %401 = vmatprep.subr.bf16.mxu0 0
      %402 = vmatpush1.bf16.msra.mxu0 0
      %403 = vmatprep.subr.bf16.mxu0 0
      %404 = vmatpush1.bf16.msra.mxu0 0
      %405 = vmatprep.subr.bf16.mxu0 0
      %406 = vmatpush1.bf16.msra.mxu0 0
      %407 = vmatprep.subr.bf16.mxu0 0
      %408 = vmatpush1.bf16.msra.mxu0 0
      %409 = vmatprep.subr.bf16.mxu0 0
      %410 = vmatpush1.bf16.msra.mxu0 0
      %411 = vmatprep.subr.bf16.mxu0 0
      %412 = vmatpush1.bf16.msra.mxu0 0
      %413 = vmatprep.subr.bf16.mxu0 0
      %414 = vmatpush1.bf16.msra.mxu0 0
      %415 = vmatprep.mubr.bf16.mxu0 0
      %416 = vmatmul.mubr.bf16.gmra.mrb[0].mxu0 %v325
      %v417 = vpop.f32.mrb[0].mxu0
      %v418 = vadd.f32 %v293, %v417
      %v419 = vpop.f32.mrb[0].mxu0
      %v420 = vpop.f32.mrb[0].mxu0
      %v421 = vadd.f32 %v293, %v420
      %v422 = vpop.f32.mrb[0].mxu0
      %423 = vmatprep.mubr.bf16.mxu0 0
      %424 = vmatmul.mubr.bf16.gmra.mrb[0].mxu0 %v328
      %v425 = vpop.f32.mrb[0].mxu0
      %v426 = vadd.f32 %v293, %v425
      %v427 = vpop.f32.mrb[0].mxu0
      %v428 = vpop.f32.mrb[0].mxu0
      %v429 = vadd.f32 %v293, %v428
      %v430 = vpop.f32.mrb[0].mxu0
      %431 = vdwg.mxu0
      %432 = vst [vmem:[#allocation2] sm:$0xff] %v365
      %433 = vst [vmem:[#allocation2 + $0x8] sm:$0xff] %v367
      %434 = vst [vmem:[#allocation2 + $0x10] sm:$0xff] %v418
      %435 = vst [vmem:[#allocation2 + $0x18] sm:$0xff] %v369
      %436 = vst [vmem:[#allocation2 + $0x20] sm:$0xff] %v371
      %437 = vst [vmem:[#allocation2 + $0x28] sm:$0xff] %v421
      %438 = vst [vmem:[#allocation2 + $0x30] sm:$0xff] %v375
      %439 = vst [vmem:[#allocation2 + $0x38] sm:$0xff] %v377
      %440 = vst [vmem:[#allocation2 + $0x40] sm:$0xff] %v426
      %441 = vst [vmem:[#allocation2 + $0x48] sm:$0xff] %v379
      %442 = vst [vmem:[#allocation2 + $0x50] sm:$0xff] %v381
      %443 = vst [vmem:[#allocation2 + $0x58] sm:$0xff] %v429
      %v444 = vld [vmem:[%s2] sm:$0xff]
      %v445 = vld [vmem:[%s2 + $0x8] sm:$0xf]
      %v446 = vld [vmem:[%s2 + $0xc] sm:$0xff]
      %v447 = vld [vmem:[%s2 + $0x14] sm:$0xf]
      %v448 = vld [vmem:[%s2 + $0x18] sm:$0xff]
      %v449 = vld [vmem:[%s2 + $0x20] sm:$0xf]
      %v450 = vld [vmem:[%s2 + $0x24] sm:$0xff]
      %v451 = vld [vmem:[%s2 + $0x2c] sm:$0xf]
      %v452 = vld [vmem:[%s2 + $0x30] sm:$0xff]
      %v453 = vld [vmem:[%s2 + $0x38] sm:$0xf]
      %v454 = vld [vmem:[%s2 + $0x3c] sm:$0xff]
      %v455 = vld [vmem:[%s2 + $0x44] sm:$0xf]
      %v456 = vld [vmem:[%s2 + $0x48] sm:$0xff]
      %v457 = vld [vmem:[%s2 + $0x50] sm:$0xf]
      %v458 = vld [vmem:[%s2 + $0x54] sm:$0xff]
      %v459 = vld [vmem:[%s2 + $0x5c] sm:$0xf]
      %v460 = vld [vmem:[%s2 + $0x60] sm:$0xff]
      %v461 = vld [vmem:[%s2 + $0x68] sm:$0xf]
      %v462 = vld [vmem:[%s2 + $0x6c] sm:$0xff]
      %v463 = vld [vmem:[%s2 + $0x74] sm:$0xf]
      %v464 = vld [vmem:[%s2 + $0x78] sm:$0xff]
      %v465 = vld [vmem:[%s2 + $0x80] sm:$0xf]
      %v466 = vld [vmem:[%s2 + $0x84] sm:$0xff]
      %v467 = vld [vmem:[%s2 + $0x8c] sm:$0xf]
      %v468 = vld [vmem:[%s2 + $0x90] sm:$0xff]
      %v469 = vld [vmem:[%s2 + $0x98] sm:$0xf]
      %v470 = vld [vmem:[%s2 + $0x9c] sm:$0xff]
      %v471 = vld [vmem:[%s2 + $0xa4] sm:$0xf]
      %v472 = vld [vmem:[%s2 + $0xa8] sm:$0xff]
      %v473 = vld [vmem:[%s2 + $0xb0] sm:$0xf]
      %v474 = vld [vmem:[%s2 + $0xb4] sm:$0xff]
      %v475 = vld [vmem:[%s2 + $0xbc] sm:$0xf]
      %v476 = vld [vmem:[%s4] sm:$0x1]
      %v477 = vld [vmem:[#allocation3] sm:$0xff]
      %s478 = smul.u32 0, 3
      %s479 = smul.addr %s478, 8
      %s480 = scalar_lea.vmem [#allocation2], %s479
      %v481 = vld [vmem:[%s480] sm:$0xff]
      %v482 = vld [vmem:[%s480 + $0x8] sm:$0xff]
      %v483 = vld [vmem:[%s480 + $0x10] sm:$0xff]
      %v484 = vpack.c.bf16 %v477, %v477
      %v517 = vunpack.c.l.b16 %v444
      %v518 = vunpack.c.h.b16 %v444
      %v519 = vunpack.c.l.b16 %v445
      %v520 = vunpack.c.l.b16 %v446
      %v521 = vunpack.c.h.b16 %v446
      %v522 = vunpack.c.l.b16 %v447
      %v523 = vunpack.c.l.b16 %v448
      %v524 = vunpack.c.h.b16 %v448
      %v525 = vunpack.c.l.b16 %v449
      %v526 = vunpack.c.l.b16 %v450
      %v527 = vunpack.c.h.b16 %v450
      %v528 = vunpack.c.l.b16 %v451
      %v529 = vunpack.c.l.b16 %v452
      %v530 = vunpack.c.h.b16 %v452
      %v531 = vunpack.c.l.b16 %v453
      %v532 = vunpack.c.l.b16 %v454
      %v533 = vunpack.c.h.b16 %v454
      %v534 = vunpack.c.l.b16 %v455
      %v535 = vunpack.c.l.b16 %v456
      %v536 = vunpack.c.h.b16 %v456
      %v537 = vunpack.c.l.b16 %v457
      %v538 = vunpack.c.l.b16 %v458
      %v539 = vunpack.c.h.b16 %v458
      %v540 = vunpack.c.l.b16 %v459
      %v541 = vunpack.c.l.b16 %v460
      %v542 = vunpack.c.h.b16 %v460
      %v543 = vunpack.c.l.b16 %v461
      %v544 = vunpack.c.l.b16 %v462
      %v545 = vunpack.c.h.b16 %v462
      %v546 = vunpack.c.l.b16 %v463
      %v547 = vunpack.c.l.b16 %v464
      %v548 = vunpack.c.h.b16 %v464
      %v549 = vunpack.c.l.b16 %v465
      %v550 = vunpack.c.l.b16 %v466
      %v551 = vunpack.c.h.b16 %v466
      %v552 = vunpack.c.l.b16 %v467
      %v553 = vunpack.c.l.b16 %v468
      %v554 = vunpack.c.h.b16 %v468
      %v555 = vunpack.c.l.b16 %v469
      %v556 = vunpack.c.l.b16 %v470
      %v557 = vunpack.c.h.b16 %v470
      %v558 = vunpack.c.l.b16 %v471
      %v559 = vunpack.c.l.b16 %v472
      %v560 = vunpack.c.h.b16 %v472
      %v561 = vunpack.c.l.b16 %v473
      %v562 = vunpack.c.l.b16 %v474
      %v563 = vunpack.c.h.b16 %v474
      %v564 = vunpack.c.l.b16 %v475
      %v565 = vpack.c.b16 %v520, %v517
      %v566 = vpack.c.b16 %v521, %v518
      %v567 = vpack.c.b16 %v522, %v519
      %v568 = vpack.c.b16 %v526, %v523
      %v569 = vpack.c.b16 %v527, %v524
      %v570 = vpack.c.b16 %v528, %v525
      %v571 = vpack.c.b16 %v532, %v529
      %v572 = vpack.c.b16 %v533, %v530
      %v573 = vpack.c.b16 %v534, %v531
      %v574 = vpack.c.b16 %v538, %v535
      %v575 = vpack.c.b16 %v539, %v536
      %v576 = vpack.c.b16 %v540, %v537
      %v577 = vpack.c.b16 %v544, %v541
      %v578 = vpack.c.b16 %v545, %v542
      %v579 = vpack.c.b16 %v546, %v543
      %v580 = vpack.c.b16 %v550, %v547
      %v581 = vpack.c.b16 %v551, %v548
      %v582 = vpack.c.b16 %v552, %v549
      %v583 = vpack.c.b16 %v556, %v553
      %v584 = vpack.c.b16 %v557, %v554
      %v585 = vpack.c.b16 %v558, %v555
      %v586 = vpack.c.b16 %v562, %v559
      %v587 = vpack.c.b16 %v563, %v560
      %v588 = vpack.c.b16 %v564, %v561
      %613 = vmatprep.subr.bf16.mxu0 %v566
      %614 = vmatpush1.bf16.msra.mxu0 %v565
      %615 = vmatprep.subr.bf16.mxu0 %v569
      %616 = vmatpush1.bf16.msra.mxu0 %v568
      %617 = vmatprep.subr.bf16.mxu0 %v572
      %618 = vmatpush1.bf16.msra.mxu0 %v571
      %619 = vmatprep.subr.bf16.mxu0 %v575
      %620 = vmatpush1.bf16.msra.mxu0 %v574
      %621 = vmatprep.subr.bf16.mxu0 %v578
      %622 = vmatpush1.bf16.msra.mxu0 %v577
      %623 = vmatprep.subr.bf16.mxu0 %v581
      %624 = vmatpush1.bf16.msra.mxu0 %v580
      %625 = vmatprep.subr.bf16.mxu0 %v584
      %626 = vmatpush1.bf16.msra.mxu0 %v583
      %627 = vmatprep.subr.bf16.mxu0 %v587
      %628 = vmatpush1.bf16.msra.mxu0 %v586
      %629 = vmatprep.subr.bf16.mxu0 0
      %630 = vmatpush1.bf16.msra.mxu0 0
      %631 = vmatprep.subr.bf16.mxu0 0
      %632 = vmatpush1.bf16.msra.mxu0 0
      %633 = vmatprep.subr.bf16.mxu0 0
      %634 = vmatpush1.bf16.msra.mxu0 0
      %635 = vmatprep.subr.bf16.mxu0 0
      %636 = vmatpush1.bf16.msra.mxu0 0
      %637 = vmatprep.subr.bf16.mxu0 0
      %638 = vmatpush1.bf16.msra.mxu0 0
      %639 = vmatprep.subr.bf16.mxu0 0
      %640 = vmatpush1.bf16.msra.mxu0 0
      %641 = vmatprep.subr.bf16.mxu0 0
      %642 = vmatpush1.bf16.msra.mxu0 0
      %643 = vmatprep.subr.bf16.mxu0 0
      %644 = vmatpush1.bf16.msra.mxu0 0
      %645 = vmatprep.mubr.bf16.mxu0 0
      %646 = vmatmul.mubr.bf16.gmra.mrb[0].mxu0 %v484
      %v647 = vpop.f32.mrb[0].mxu0
      %v648 = vadd.f32 0.0, %v647
      %v649 = vpop.f32.mrb[0].mxu0
      %v650 = vadd.f32 0.0, %v649
      %v651 = vpop.f32.mrb[0].mxu0
      %v652 = vpop.f32.mrb[0].mxu0
      %653 = vdwg.mxu0
      %654 = vmatprep.subr.bf16.mxu0 0
      %655 = vmatpush1.bf16.msra.mxu0 %v567
      %656 = vmatprep.subr.bf16.mxu0 0
      %657 = vmatpush1.bf16.msra.mxu0 %v570
      %658 = vmatprep.subr.bf16.mxu0 0
      %659 = vmatpush1.bf16.msra.mxu0 %v573
      %660 = vmatprep.subr.bf16.mxu0 0
      %661 = vmatpush1.bf16.msra.mxu0 %v576
      %662 = vmatprep.subr.bf16.mxu0 0
      %663 = vmatpush1.bf16.msra.mxu0 %v579
      %664 = vmatprep.subr.bf16.mxu0 0
      %665 = vmatpush1.bf16.msra.mxu0 %v582
      %666 = vmatprep.subr.bf16.mxu0 0
      %667 = vmatpush1.bf16.msra.mxu0 %v585
      %668 = vmatprep.subr.bf16.mxu0 0
      %669 = vmatpush1.bf16.msra.mxu0 %v588
      %670 = vmatprep.subr.bf16.mxu0 0
      %671 = vmatpush1.bf16.msra.mxu0 0
      %672 = vmatprep.subr.bf16.mxu0 0
      %673 = vmatpush1.bf16.msra.mxu0 0
      %674 = vmatprep.subr.bf16.mxu0 0
      %675 = vmatpush1.bf16.msra.mxu0 0
      %676 = vmatprep.subr.bf16.mxu0 0
      %677 = vmatpush1.bf16.msra.mxu0 0
      %678 = vmatprep.subr.bf16.mxu0 0
      %679 = vmatpush1.bf16.msra.mxu0 0
      %680 = vmatprep.subr.bf16.mxu0 0
      %681 = vmatpush1.bf16.msra.mxu0 0
      %682 = vmatprep.subr.bf16.mxu0 0
      %683 = vmatpush1.bf16.msra.mxu0 0
      %684 = vmatprep.subr.bf16.mxu0 0
      %685 = vmatpush1.bf16.msra.mxu0 0
      %686 = vmatprep.mubr.bf16.mxu0 0
      %687 = vmatmul.mubr.bf16.gmra.mrb[0].mxu0 %v484
      %v688 = vpop.f32.mrb[0].mxu0
      %v689 = vadd.f32 0.0, %v688
      %v690 = vpop.f32.mrb[0].mxu0
      %v691 = vpop.f32.mrb[0].mxu0
      %v692 = vpop.f32.mrb[0].mxu0
      %693 = vdwg.mxu0
      %v694 = vadd.f32 %v481, %v648
      %v695 = vmul.f32 %v694, 0.5
      %v696 = vtanh.pop %v695
      %v697 = vadd.f32 %v696, 1.0
      %v698 = vmul.f32 %v697, 0.5
      %v699 = vadd.f32 %v482, %v650
      %v700 = vmul.f32 %v699, 0.5
      %v701 = vtanh.pop %v700
      %v702 = vadd.f32 %v701, 1.0
      %v703 = vmul.f32 %v702, 0.5
      %v705 = vlaneseq
      %v706 = vshrl.u32 %v705, 7
      %v707 = vsub.s32 0, %v706
      %v708 = vrot.slane %v476, %v707
      %v710 = vadd.f32 %v689, %v708
      %v711 = vmul.f32 %v698, %v710
      %v712 = vadd.f32 %v483, %v711
      %v713 = vtanh.pop %v712
      %v714 = vsub.f32 1.0, %v703
      %v715 = vmul.f32 %v714, %v713
      %v716 = vmul.f32 %v703, %v477
      %v717 = vadd.f32 %v715, %v716
      %s718 = smul.u32 1, 3
      %s719 = smul.addr %s718, 8
      %s720 = scalar_lea.vmem [#allocation2], %s719
      %v721 = vld [vmem:[%s720] sm:$0xff]
      %v722 = vld [vmem:[%s720 + $0x8] sm:$0xff]
      %v723 = vld [vmem:[%s720 + $0x10] sm:$0xff]
      %v724 = vpack.c.bf16 %v717, %v717
      %725 = vmatprep.subr.bf16.mxu0 %v566
      %726 = vmatpush1.bf16.msra.mxu0 %v565
      %727 = vmatprep.subr.bf16.mxu0 %v569
      %728 = vmatpush1.bf16.msra.mxu0 %v568
      %729 = vmatprep.subr.bf16.mxu0 %v572
      %730 = vmatpush1.bf16.msra.mxu0 %v571
      %731 = vmatprep.subr.bf16.mxu0 %v575
      %732 = vmatpush1.bf16.msra.mxu0 %v574
      %733 = vmatprep.subr.bf16.mxu0 %v578
      %734 = vmatpush1.bf16.msra.mxu0 %v577
      %735 = vmatprep.subr.bf16.mxu0 %v581
      %736 = vmatpush1.bf16.msra.mxu0 %v580
      %737 = vmatprep.subr.bf16.mxu0 %v584
      %738 = vmatpush1.bf16.msra.mxu0 %v583
      %739 = vmatprep.subr.bf16.mxu0 %v587
      %740 = vmatpush1.bf16.msra.mxu0 %v586
      %741 = vmatprep.subr.bf16.mxu0 0
      %742 = vmatpush1.bf16.msra.mxu0 0
      %743 = vmatprep.subr.bf16.mxu0 0
      %744 = vmatpush1.bf16.msra.mxu0 0
      %745 = vmatprep.subr.bf16.mxu0 0
      %746 = vmatpush1.bf16.msra.mxu0 0
      %747 = vmatprep.subr.bf16.mxu0 0
      %748 = vmatpush1.bf16.msra.mxu0 0
      %749 = vmatprep.subr.bf16.mxu0 0
      %750 = vmatpush1.bf16.msra.mxu0 0
      %751 = vmatprep.subr.bf16.mxu0 0
      %752 = vmatpush1.bf16.msra.mxu0 0
      %753 = vmatprep.subr.bf16.mxu0 0
      %754 = vmatpush1.bf16.msra.mxu0 0
      %755 = vmatprep.subr.bf16.mxu0 0
      %756 = vmatpush1.bf16.msra.mxu0 0
      %757 = vmatprep.mubr.bf16.mxu0 0
      %758 = vmatmul.mubr.bf16.gmra.mrb[0].mxu0 %v724
      %v759 = vpop.f32.mrb[0].mxu0
      %v760 = vadd.f32 0.0, %v759
      %v761 = vpop.f32.mrb[0].mxu0
      %v762 = vadd.f32 0.0, %v761
      %v763 = vpop.f32.mrb[0].mxu0
      %v764 = vpop.f32.mrb[0].mxu0
      %765 = vdwg.mxu0
      %766 = vmatprep.subr.bf16.mxu0 0
      %767 = vmatpush1.bf16.msra.mxu0 %v567
      %768 = vmatprep.subr.bf16.mxu0 0
      %769 = vmatpush1.bf16.msra.mxu0 %v570
      %770 = vmatprep.subr.bf16.mxu0 0
      %771 = vmatpush1.bf16.msra.mxu0 %v573
      %772 = vmatprep.subr.bf16.mxu0 0
      %773 = vmatpush1.bf16.msra.mxu0 %v576
      %774 = vmatprep.subr.bf16.mxu0 0
      %775 = vmatpush1.bf16.msra.mxu0 %v579
      %776 = vmatprep.subr.bf16.mxu0 0
      %777 = vmatpush1.bf16.msra.mxu0 %v582
      %778 = vmatprep.subr.bf16.mxu0 0
      %779 = vmatpush1.bf16.msra.mxu0 %v585
      %780 = vmatprep.subr.bf16.mxu0 0
      %781 = vmatpush1.bf16.msra.mxu0 %v588
      %782 = vmatprep.subr.bf16.mxu0 0
      %783 = vmatpush1.bf16.msra.mxu0 0
      %784 = vmatprep.subr.bf16.mxu0 0
      %785 = vmatpush1.bf16.msra.mxu0 0
      %786 = vmatprep.subr.bf16.mxu0 0
      %787 = vmatpush1.bf16.msra.mxu0 0
      %788 = vmatprep.subr.bf16.mxu0 0
      %789 = vmatpush1.bf16.msra.mxu0 0
      %790 = vmatprep.subr.bf16.mxu0 0
      %791 = vmatpush1.bf16.msra.mxu0 0
      %792 = vmatprep.subr.bf16.mxu0 0
      %793 = vmatpush1.bf16.msra.mxu0 0
      %794 = vmatprep.subr.bf16.mxu0 0
      %795 = vmatpush1.bf16.msra.mxu0 0
      %796 = vmatprep.subr.bf16.mxu0 0
      %797 = vmatpush1.bf16.msra.mxu0 0
      %798 = vmatprep.mubr.bf16.mxu0 0
      %799 = vmatmul.mubr.bf16.gmra.mrb[0].mxu0 %v724
      %v800 = vpop.f32.mrb[0].mxu0
      %v801 = vadd.f32 0.0, %v800
      %v802 = vpop.f32.mrb[0].mxu0
      %v803 = vpop.f32.mrb[0].mxu0
      %v804 = vpop.f32.mrb[0].mxu0
      %805 = vdwg.mxu0
      %v806 = vadd.f32 %v721, %v760
      %v807 = vmul.f32 %v806, 0.5
      %v808 = vtanh.pop %v807
      %v809 = vadd.f32 %v808, 1.0
      %v810 = vmul.f32 %v809, 0.5
      %v811 = vadd.f32 %v722, %v762
      %v812 = vmul.f32 %v811, 0.5
      %v813 = vtanh.pop %v812
      %v814 = vadd.f32 %v813, 1.0
      %v815 = vmul.f32 %v814, 0.5
      %v816 = vadd.f32 %v801, %v708
      %v817 = vmul.f32 %v810, %v816
      %v818 = vadd.f32 %v723, %v817
      %v819 = vtanh.pop %v818
      %v820 = vsub.f32 1.0, %v815
      %v821 = vmul.f32 %v820, %v819
      %v822 = vmul.f32 %v815, %v717
      %v823 = vadd.f32 %v821, %v822
      %s824 = smul.u32 2, 3
      %s825 = smul.addr %s824, 8
      %s826 = scalar_lea.vmem [#allocation2], %s825
      %v827 = vld [vmem:[%s826] sm:$0xff]
      %v828 = vld [vmem:[%s826 + $0x8] sm:$0xff]
      %v829 = vld [vmem:[%s826 + $0x10] sm:$0xff]
      %v830 = vpack.c.bf16 %v823, %v823
      %831 = vmatprep.subr.bf16.mxu0 %v566
      %832 = vmatpush1.bf16.msra.mxu0 %v565
      %833 = vmatprep.subr.bf16.mxu0 %v569
      %834 = vmatpush1.bf16.msra.mxu0 %v568
      %835 = vmatprep.subr.bf16.mxu0 %v572
      %836 = vmatpush1.bf16.msra.mxu0 %v571
      %837 = vmatprep.subr.bf16.mxu0 %v575
      %838 = vmatpush1.bf16.msra.mxu0 %v574
      %839 = vmatprep.subr.bf16.mxu0 %v578
      %840 = vmatpush1.bf16.msra.mxu0 %v577
      %841 = vmatprep.subr.bf16.mxu0 %v581
      %842 = vmatpush1.bf16.msra.mxu0 %v580
      %843 = vmatprep.subr.bf16.mxu0 %v584
      %844 = vmatpush1.bf16.msra.mxu0 %v583
      %845 = vmatprep.subr.bf16.mxu0 %v587
      %846 = vmatpush1.bf16.msra.mxu0 %v586
      %847 = vmatprep.subr.bf16.mxu0 0
      %848 = vmatpush1.bf16.msra.mxu0 0
      %849 = vmatprep.subr.bf16.mxu0 0
      %850 = vmatpush1.bf16.msra.mxu0 0
      %851 = vmatprep.subr.bf16.mxu0 0
      %852 = vmatpush1.bf16.msra.mxu0 0
      %853 = vmatprep.subr.bf16.mxu0 0
      %854 = vmatpush1.bf16.msra.mxu0 0
      %855 = vmatprep.subr.bf16.mxu0 0
      %856 = vmatpush1.bf16.msra.mxu0 0
      %857 = vmatprep.subr.bf16.mxu0 0
      %858 = vmatpush1.bf16.msra.mxu0 0
      %859 = vmatprep.subr.bf16.mxu0 0
      %860 = vmatpush1.bf16.msra.mxu0 0
      %861 = vmatprep.subr.bf16.mxu0 0
      %862 = vmatpush1.bf16.msra.mxu0 0
      %863 = vmatprep.mubr.bf16.mxu0 0
      %864 = vmatmul.mubr.bf16.gmra.mrb[0].mxu0 %v830
      %v865 = vpop.f32.mrb[0].mxu0
      %v866 = vadd.f32 0.0, %v865
      %v867 = vpop.f32.mrb[0].mxu0
      %v868 = vadd.f32 0.0, %v867
      %v869 = vpop.f32.mrb[0].mxu0
      %v870 = vpop.f32.mrb[0].mxu0
      %871 = vdwg.mxu0
      %872 = vmatprep.subr.bf16.mxu0 0
      %873 = vmatpush1.bf16.msra.mxu0 %v567
      %874 = vmatprep.subr.bf16.mxu0 0
      %875 = vmatpush1.bf16.msra.mxu0 %v570
      %876 = vmatprep.subr.bf16.mxu0 0
      %877 = vmatpush1.bf16.msra.mxu0 %v573
      %878 = vmatprep.subr.bf16.mxu0 0
      %879 = vmatpush1.bf16.msra.mxu0 %v576
      %880 = vmatprep.subr.bf16.mxu0 0
      %881 = vmatpush1.bf16.msra.mxu0 %v579
      %882 = vmatprep.subr.bf16.mxu0 0
      %883 = vmatpush1.bf16.msra.mxu0 %v582
      %884 = vmatprep.subr.bf16.mxu0 0
      %885 = vmatpush1.bf16.msra.mxu0 %v585
      %886 = vmatprep.subr.bf16.mxu0 0
      %887 = vmatpush1.bf16.msra.mxu0 %v588
      %888 = vmatprep.subr.bf16.mxu0 0
      %889 = vmatpush1.bf16.msra.mxu0 0
      %890 = vmatprep.subr.bf16.mxu0 0
      %891 = vmatpush1.bf16.msra.mxu0 0
      %892 = vmatprep.subr.bf16.mxu0 0
      %893 = vmatpush1.bf16.msra.mxu0 0
      %894 = vmatprep.subr.bf16.mxu0 0
      %895 = vmatpush1.bf16.msra.mxu0 0
      %896 = vmatprep.subr.bf16.mxu0 0
      %897 = vmatpush1.bf16.msra.mxu0 0
      %898 = vmatprep.subr.bf16.mxu0 0
      %899 = vmatpush1.bf16.msra.mxu0 0
      %900 = vmatprep.subr.bf16.mxu0 0
      %901 = vmatpush1.bf16.msra.mxu0 0
      %902 = vmatprep.subr.bf16.mxu0 0
      %903 = vmatpush1.bf16.msra.mxu0 0
      %904 = vmatprep.mubr.bf16.mxu0 0
      %905 = vmatmul.mubr.bf16.gmra.mrb[0].mxu0 %v830
      %v906 = vpop.f32.mrb[0].mxu0
      %v907 = vadd.f32 0.0, %v906
      %v908 = vpop.f32.mrb[0].mxu0
      %v909 = vpop.f32.mrb[0].mxu0
      %v910 = vpop.f32.mrb[0].mxu0
      %911 = vdwg.mxu0
      %v912 = vadd.f32 %v827, %v866
      %v913 = vmul.f32 %v912, 0.5
      %v914 = vtanh.pop %v913
      %v915 = vadd.f32 %v914, 1.0
      %v916 = vmul.f32 %v915, 0.5
      %v917 = vadd.f32 %v828, %v868
      %v918 = vmul.f32 %v917, 0.5
      %v919 = vtanh.pop %v918
      %v920 = vadd.f32 %v919, 1.0
      %v921 = vmul.f32 %v920, 0.5
      %v922 = vadd.f32 %v907, %v708
      %v923 = vmul.f32 %v916, %v922
      %v924 = vadd.f32 %v829, %v923
      %v925 = vtanh.pop %v924
      %v926 = vsub.f32 1.0, %v921
      %v927 = vmul.f32 %v926, %v925
      %v928 = vmul.f32 %v921, %v823
      %v929 = vadd.f32 %v927, %v928
      %s930 = smul.u32 3, 3
      %s931 = smul.addr %s930, 8
      %s932 = scalar_lea.vmem [#allocation2], %s931
      %v933 = vld [vmem:[%s932] sm:$0xff]
      %v934 = vld [vmem:[%s932 + $0x8] sm:$0xff]
      %v935 = vld [vmem:[%s932 + $0x10] sm:$0xff]
      %v936 = vpack.c.bf16 %v929, %v929
      %937 = vmatprep.subr.bf16.mxu0 %v566
      %938 = vmatpush1.bf16.msra.mxu0 %v565
      %939 = vmatprep.subr.bf16.mxu0 %v569
      %940 = vmatpush1.bf16.msra.mxu0 %v568
      %941 = vmatprep.subr.bf16.mxu0 %v572
      %942 = vmatpush1.bf16.msra.mxu0 %v571
      %943 = vmatprep.subr.bf16.mxu0 %v575
      %944 = vmatpush1.bf16.msra.mxu0 %v574
      %945 = vmatprep.subr.bf16.mxu0 %v578
      %946 = vmatpush1.bf16.msra.mxu0 %v577
      %947 = vmatprep.subr.bf16.mxu0 %v581
      %948 = vmatpush1.bf16.msra.mxu0 %v580
      %949 = vmatprep.subr.bf16.mxu0 %v584
      %950 = vmatpush1.bf16.msra.mxu0 %v583
      %951 = vmatprep.subr.bf16.mxu0 %v587
      %952 = vmatpush1.bf16.msra.mxu0 %v586
      %953 = vmatprep.subr.bf16.mxu0 0
      %954 = vmatpush1.bf16.msra.mxu0 0
      %955 = vmatprep.subr.bf16.mxu0 0
      %956 = vmatpush1.bf16.msra.mxu0 0
      %957 = vmatprep.subr.bf16.mxu0 0
      %958 = vmatpush1.bf16.msra.mxu0 0
      %959 = vmatprep.subr.bf16.mxu0 0
      %960 = vmatpush1.bf16.msra.mxu0 0
      %961 = vmatprep.subr.bf16.mxu0 0
      %962 = vmatpush1.bf16.msra.mxu0 0
      %963 = vmatprep.subr.bf16.mxu0 0
      %964 = vmatpush1.bf16.msra.mxu0 0
      %965 = vmatprep.subr.bf16.mxu0 0
      %966 = vmatpush1.bf16.msra.mxu0 0
      %967 = vmatprep.subr.bf16.mxu0 0
      %968 = vmatpush1.bf16.msra.mxu0 0
      %969 = vmatprep.mubr.bf16.mxu0 0
      %970 = vmatmul.mubr.bf16.gmra.mrb[0].mxu0 %v936
      %v971 = vpop.f32.mrb[0].mxu0
      %v972 = vadd.f32 0.0, %v971
      %v973 = vpop.f32.mrb[0].mxu0
      %v974 = vadd.f32 0.0, %v973
      %v975 = vpop.f32.mrb[0].mxu0
      %v976 = vpop.f32.mrb[0].mxu0
      %977 = vdwg.mxu0
      %978 = vmatprep.subr.bf16.mxu0 0
      %979 = vmatpush1.bf16.msra.mxu0 %v567
      %980 = vmatprep.subr.bf16.mxu0 0
      %981 = vmatpush1.bf16.msra.mxu0 %v570
      %982 = vmatprep.subr.bf16.mxu0 0
      %983 = vmatpush1.bf16.msra.mxu0 %v573
      %984 = vmatprep.subr.bf16.mxu0 0
      %985 = vmatpush1.bf16.msra.mxu0 %v576
      %986 = vmatprep.subr.bf16.mxu0 0
      %987 = vmatpush1.bf16.msra.mxu0 %v579
      %988 = vmatprep.subr.bf16.mxu0 0
      %989 = vmatpush1.bf16.msra.mxu0 %v582
      %990 = vmatprep.subr.bf16.mxu0 0
      %991 = vmatpush1.bf16.msra.mxu0 %v585
      %992 = vmatprep.subr.bf16.mxu0 0
      %993 = vmatpush1.bf16.msra.mxu0 %v588
      %994 = vmatprep.subr.bf16.mxu0 0
      %995 = vmatpush1.bf16.msra.mxu0 0
      %996 = vmatprep.subr.bf16.mxu0 0
      %997 = vmatpush1.bf16.msra.mxu0 0
      %998 = vmatprep.subr.bf16.mxu0 0
      %999 = vmatpush1.bf16.msra.mxu0 0
      %1000 = vmatprep.subr.bf16.mxu0 0
      %1001 = vmatpush1.bf16.msra.mxu0 0
      %1002 = vmatprep.subr.bf16.mxu0 0
      %1003 = vmatpush1.bf16.msra.mxu0 0
      %1004 = vmatprep.subr.bf16.mxu0 0
      %1005 = vmatpush1.bf16.msra.mxu0 0
      %1006 = vmatprep.subr.bf16.mxu0 0
      %1007 = vmatpush1.bf16.msra.mxu0 0
      %1008 = vmatprep.subr.bf16.mxu0 0
      %1009 = vmatpush1.bf16.msra.mxu0 0
      %1010 = vmatprep.mubr.bf16.mxu0 0
      %1011 = vmatmul.mubr.bf16.gmra.mrb[0].mxu0 %v936
      %v1012 = vpop.f32.mrb[0].mxu0
      %v1013 = vadd.f32 0.0, %v1012
      %v1014 = vpop.f32.mrb[0].mxu0
      %v1015 = vpop.f32.mrb[0].mxu0
      %v1016 = vpop.f32.mrb[0].mxu0
      %1017 = vdwg.mxu0
      %v1018 = vadd.f32 %v933, %v972
      %v1019 = vmul.f32 %v1018, 0.5
      %v1020 = vtanh.pop %v1019
      %v1021 = vadd.f32 %v1020, 1.0
      %v1022 = vmul.f32 %v1021, 0.5
      %v1023 = vadd.f32 %v934, %v974
      %v1024 = vmul.f32 %v1023, 0.5
      %v1025 = vtanh.pop %v1024
      %v1026 = vadd.f32 %v1025, 1.0
      %v1027 = vmul.f32 %v1026, 0.5
      %v1028 = vadd.f32 %v1013, %v708
      %v1029 = vmul.f32 %v1022, %v1028
      %v1030 = vadd.f32 %v935, %v1029
      %v1031 = vtanh.pop %v1030
      %v1032 = vsub.f32 1.0, %v1027
      %v1033 = vmul.f32 %v1032, %v1031
      %v1034 = vmul.f32 %v1027, %v929
      %v1035 = vadd.f32 %v1033, %v1034
      %1036 = vst [vmem:[#allocation3] sm:$0xff] %v1035
      %p1037 = scmp.eq.s32.totalorder %s18, 1
      // Predicated region
      $region53: #{rnn_forward.1} parent=47 // pred_check
        %p1038 = pneg %p1037
      $region54: #{rnn_forward.1} parent=47 // pred_check_branch
        %1040 = sbr.rel (%p1038) target = $region56
      $region55: #{rnn_forward.1} parent=47 // pred_region
        %v1041 = vpack.c.bf16 %v1035, %v1035
        %v1042 = vld [vmem:[%s5] sm:$0xf]
        %v1043 = vld [vmem:[%s5 + $0x4] sm:$0xf]
        %v1044 = vld [vmem:[%s5 + $0x8] sm:$0xf]
        %v1045 = vld [vmem:[%s5 + $0xc] sm:$0xf]
        %v1046 = vld [vmem:[%s5 + $0x10] sm:$0xf]
        %v1047 = vld [vmem:[%s5 + $0x14] sm:$0xf]
        %v1048 = vld [vmem:[%s5 + $0x18] sm:$0xf]
        %v1049 = vld [vmem:[%s5 + $0x1c] sm:$0xf]
        %v1050 = vld [vmem:[%s5 + $0x20] sm:$0xf]
        %v1051 = vld [vmem:[%s5 + $0x24] sm:$0xf]
        %v1052 = vld [vmem:[%s5 + $0x28] sm:$0xf]
        %v1053 = vld [vmem:[%s5 + $0x2c] sm:$0xf]
        %v1054 = vld [vmem:[%s5 + $0x30] sm:$0xf]
        %v1055 = vld [vmem:[%s5 + $0x34] sm:$0xf]
        %v1056 = vld [vmem:[%s5 + $0x38] sm:$0xf]
        %v1057 = vld [vmem:[%s5 + $0x3c] sm:$0xf]
        %v1058 = vld [vmem:[%s6] sm:$0x1]
        %v1060 = vlaneseq
        %v1061 = vshrl.u32 %v1060, 7
        %v1062 = vsub.s32 0, %v1061
        %v1063 = vrot.slane %v1058, %v1062
        %v1081 = vunpack.c.l.b16 %v1042
        %v1082 = vunpack.c.l.b16 %v1043
        %v1083 = vunpack.c.l.b16 %v1044
        %v1084 = vunpack.c.l.b16 %v1045
        %v1085 = vunpack.c.l.b16 %v1046
        %v1086 = vunpack.c.l.b16 %v1047
        %v1087 = vunpack.c.l.b16 %v1048
        %v1088 = vunpack.c.l.b16 %v1049
        %v1089 = vunpack.c.l.b16 %v1050
        %v1090 = vunpack.c.l.b16 %v1051
        %v1091 = vunpack.c.l.b16 %v1052
        %v1092 = vunpack.c.l.b16 %v1053
        %v1093 = vunpack.c.l.b16 %v1054
        %v1094 = vunpack.c.l.b16 %v1055
        %v1095 = vunpack.c.l.b16 %v1056
        %v1096 = vunpack.c.l.b16 %v1057
        %v1097 = vpack.c.b16 %v1082, %v1081
        %v1098 = vpack.c.b16 %v1084, %v1083
        %v1099 = vpack.c.b16 %v1086, %v1085
        %v1100 = vpack.c.b16 %v1088, %v1087
        %v1101 = vpack.c.b16 %v1090, %v1089
        %v1102 = vpack.c.b16 %v1092, %v1091
        %v1103 = vpack.c.b16 %v1094, %v1093
        %v1104 = vpack.c.b16 %v1096, %v1095
        %1113 = vmatprep.subr.bf16.mxu0 0
        %1114 = vmatpush1.bf16.msra.mxu0 %v1097
        %1115 = vmatprep.subr.bf16.mxu0 0
        %1116 = vmatpush1.bf16.msra.mxu0 %v1098
        %1117 = vmatprep.subr.bf16.mxu0 0
        %1118 = vmatpush1.bf16.msra.mxu0 %v1099
        %1119 = vmatprep.subr.bf16.mxu0 0
        %1120 = vmatpush1.bf16.msra.mxu0 %v1100
        %1121 = vmatprep.subr.bf16.mxu0 0
        %1122 = vmatpush1.bf16.msra.mxu0 %v1101
        %1123 = vmatprep.subr.bf16.mxu0 0
        %1124 = vmatpush1.bf16.msra.mxu0 %v1102
        %1125 = vmatprep.subr.bf16.mxu0 0
        %1126 = vmatpush1.bf16.msra.mxu0 %v1103
        %1127 = vmatprep.subr.bf16.mxu0 0
        %1128 = vmatpush1.bf16.msra.mxu0 %v1104
        %1129 = vmatprep.subr.bf16.mxu0 0
        %1130 = vmatpush1.bf16.msra.mxu0 0
        %1131 = vmatprep.subr.bf16.mxu0 0
        %1132 = vmatpush1.bf16.msra.mxu0 0
        %1133 = vmatprep.subr.bf16.mxu0 0
        %1134 = vmatpush1.bf16.msra.mxu0 0
        %1135 = vmatprep.subr.bf16.mxu0 0
        %1136 = vmatpush1.bf16.msra.mxu0 0
        %1137 = vmatprep.subr.bf16.mxu0 0
        %1138 = vmatpush1.bf16.msra.mxu0 0
        %1139 = vmatprep.subr.bf16.mxu0 0
        %1140 = vmatpush1.bf16.msra.mxu0 0
        %1141 = vmatprep.subr.bf16.mxu0 0
        %1142 = vmatpush1.bf16.msra.mxu0 0
        %1143 = vmatprep.subr.bf16.mxu0 0
        %1144 = vmatpush1.bf16.msra.mxu0 0
        %1145 = vmatprep.mubr.bf16.mxu0 0
        %1146 = vmatmul.mubr.bf16.gmra.mrb[0].mxu0 %v1041
        %v1147 = vpop.f32.mrb[0].mxu0
        %v1148 = vadd.f32 %v1063, %v1147
        %v1149 = vpop.f32.mrb[0].mxu0
        %v1150 = vpop.f32.mrb[0].mxu0
        %v1151 = vpop.f32.mrb[0].mxu0
        %1152 = vdwg.mxu0
        %vm1153 = vcmask 31744
        %1154 = vst.msk [vmem:[%s7] sm:$0xff] %vm1153, %v1148
      $region56: #{rnn_forward.1} parent=47 // pred_fallthru
        _
      // Predicated region
      $region57: #{rnn_forward.1} parent=47 // pred_check
        %p1155 = pneg %p183
      $region58: #{rnn_forward.1} parent=47 // pred_check_branch
        %1157 = sbr.rel (%p1155) target = $region60
      $region59: #{rnn_forward.1} parent=47 // pred_region
        _
      $region60: #{rnn_forward.1} parent=47 // pred_fallthru
        _
      // Predicated region
      $region61: #{rnn_forward.1} parent=47 // pred_check
        %p1158 = pneg %p183
      $region62: #{rnn_forward.1} parent=47 // pred_check_branch
        %1160 = sbr.rel (%p1158) target = $region64
      $region63: #{rnn_forward.1} parent=47 // pred_region
        _
      $region64: #{rnn_forward.1} parent=47 // pred_fallthru
        _
    $region48: #{rnn_forward.1} parent=5 // pred_fallthru
      _
    %p1161 = scmp.le.s32.totalorder 2, %s13
    // Predicated region
    $region65: #{rnn_forward.1} parent=5 // pred_check
      %p1162 = pneg %p1161
    $region66: #{rnn_forward.1} parent=5 // pred_check_branch
      %1164 = sbr.rel (%p1162) target = $region68
    $region67: #{rnn_forward.1} parent=5 // pred_region
      %s1165 = ssub.s32 %s13, 2
    $region68: #{rnn_forward.1} parent=5 // pred_fallthru
      _
  $region6: #{rnn_forward.1} parent=0 // loop_footer
    %s17 = sadd.s32 1, %s13
  $region7: #{rnn_forward.1} parent=0 // loop_footer_branch
    %12 = sbr.rel target = $region3
  $region8: #{rnn_forward.1} parent=0 // loop_exit
    _

</llo_original>
